<compile_context>
chip_gen: v7x
topology: tpu7x:2x2x1
jax: 0.10.0
libtpu: 0.0.40
codegen_flags: <defaults>
</compile_context>

<pallas_src>
import jax
import jax.numpy as jnp
from jax.experimental import pallas as pl
from jax.experimental.pallas import tpu as pltpu


def _mlp_kernel(x_ref, w1_ref, s1_ref, b1_ref, w2_ref, s2_ref, b2_ref, o_ref):
    k = pl.program_id(0)

    # Fold b2 into the accumulator init; o_ref (f32) is resident across the
    # reduction axis (constant out index_map), so we accumulate into it
    # directly and need no scratch.  Reduction axis is "arbitrary" -> no race.
    @pl.when(k == 0)
    def _():
        o_ref[...] = jnp.broadcast_to(b2_ref[...], o_ref.shape).astype(o_ref.dtype)

    # --- First linear + ReLU on this hidden tile ---------------------------
    # int8 -> bf16 convert on the VPU (minimal dequant cost: v5e/v6e MXUs have
    # no mixed bf16*int8 mode).  Per-output-channel scale is applied to the
    # (B, tile_h) dot result, not the (in_dim, tile_h) weight tile.
    w1 = w1_ref[...].astype(jnp.bfloat16)
    h = jnp.dot(x_ref[...], w1, preferred_element_type=jnp.float32)
    h = jnp.maximum(h * s1_ref[...] + b1_ref[...], 0.0)

    # --- Second linear: partial contribution of this hidden tile -----------
    # s2 is per *final* output channel, independent of k, so scaling each
    # partial sum and accumulating is exact.
    w2 = w2_ref[...].astype(jnp.bfloat16)
    part = jnp.dot(h.astype(jnp.bfloat16), w2, preferred_element_type=jnp.float32)
    o_ref[...] += part * s2_ref[...]


def projection_head(x, w1_q, s1, b1, w2_q, s2, b2, *, tile_h=2048):
    """x: (B, in_dim) bf16 (or f32); w1_q: (in_dim, hidden) int8;
       s1: (hidden,) f32 per-output-channel dequant scale; b1: (hidden,) f32;
       w2_q: (hidden, out_dim) int8; s2: (out_dim,) f32; b2: (out_dim,) f32.
       Returns (B, out_dim) f32.  Numerics contract: bf16 operands on the MXU,
       f32 accumulation, weight-only int8 quantization."""
    B, in_dim = x.shape
    hidden = w1_q.shape[1]
    out_dim = w2_q.shape[1]
    tile_h = min(tile_h, hidden)
    assert hidden % tile_h == 0

    s1_2d = s1.reshape(1, hidden).astype(jnp.float32)
    b1_2d = b1.reshape(1, hidden).astype(jnp.float32)
    s2_2d = s2.reshape(1, out_dim).astype(jnp.float32)
    b2_2d = b2.reshape(1, out_dim).astype(jnp.float32)

    grid = (hidden // tile_h,)  # tile_h = hidden -> single grid step

    # Advisory cost for XLA's scheduler: short, bandwidth-bound op.
    flops = 2 * B * in_dim * hidden + 2 * B * hidden * out_dim
    bytes_accessed = (
        x.size * x.dtype.itemsize          # activations in
        + w1_q.size + w2_q.size            # int8 weights: 1 byte/elem
        + (2 * hidden + 2 * out_dim) * 4   # scales + biases
        + B * out_dim * 4                  # output
    )

    return pl.pallas_call(
        _mlp_kernel,
        out_shape=jax.ShapeDtypeStruct((B, out_dim), jnp.float32),
        grid_spec=pltpu.PrefetchScalarGridSpec(
            num_scalar_prefetch=0,
            grid=grid,
            in_specs=[
                pl.BlockSpec((B, in_dim), lambda k: (0, 0)),        # x (resident)
                pl.BlockSpec((in_dim, tile_h), lambda k: (0, k)),   # W1 int8 tile
                pl.BlockSpec((1, tile_h), lambda k: (0, k)),        # s1 tile
                pl.BlockSpec((1, tile_h), lambda k: (0, k)),        # b1 tile
                pl.BlockSpec((tile_h, out_dim), lambda k: (k, 0)),  # W2 int8 tile
                pl.BlockSpec((1, out_dim), lambda k: (0, 0)),       # s2 (resident)
                pl.BlockSpec((1, out_dim), lambda k: (0, 0)),       # b2 (resident)
            ],
            out_specs=pl.BlockSpec((B, out_dim), lambda k: (0, 0)),
        ),
        compiler_params=pltpu.CompilerParams(
            dimension_semantics=("arbitrary",),
            # Kernel needs ~3 MiB double-buffered with int8 weights at
            # tile_h=2048; keep the scoped-VMEM footprint small so adjacent
            # XLA fusions keep their headroom (esp. v7x: 32 MiB scoped / 64 phys).
            vmem_limit_bytes=12 * 1024 * 1024),
        cost_estimate=pl.CostEstimate(
            flops=flops, transcendentals=0, bytes_accessed=bytes_accessed),
    )(x, w1_q, s1_2d, b1_2d, w2_q, s2_2d, b2_2d)


def _quantize_per_out_channel(w_f32):
    """Symmetric weight-only int8 quantization, per output column.
       w_f32: (in, out) -> (int8 (in, out), f32 scale (out,))."""
    amax = jnp.max(jnp.abs(w_f32), axis=0, keepdims=True)
    scale = jnp.maximum(amax, 1e-8) / 127.0
    w_q = jnp.clip(jnp.round(w_f32 / scale), -127, 127).astype(jnp.int8)
    return w_q, scale.reshape(-1)


if __name__ == "__main__":
    # Module hyperparameters (INPUT_DIM / PROJ_DIM picked small; hidden fixed
    # at 2048 by the module definition).
    IN_DIM = 512
    HIDDEN = 2048
    OUT_DIM = 128
    BATCH = 2

    key = jax.random.PRNGKey(0)
    kx, k1, k2, k3, k4 = jax.random.split(key, 5)

    x_f32 = jax.random.normal(kx, (BATCH, IN_DIM), dtype=jnp.float32)
    # Deterministic synthetic parameters (kernel layout: (in, out)).
    w1_f32 = jax.random.normal(k1, (IN_DIM, HIDDEN), dtype=jnp.float32) * 0.02
    b1 = jax.random.normal(k2, (HIDDEN,), dtype=jnp.float32) * 0.02
    w2_f32 = jax.random.normal(k3, (HIDDEN, OUT_DIM), dtype=jnp.float32) * 0.02
    b2 = jax.random.normal(k4, (OUT_DIM,), dtype=jnp.float32) * 0.02

    # Caller-side storage per the perf review: int8 weights + per-channel f32
    # scales (halves HBM traffic vs bf16), activations in bf16.
    # TODO(synk): on v7x, store weights as fp8 e4m3 and feed the MXU directly.
    w1_q, s1 = _quantize_per_out_channel(w1_f32)
    w2_q, s2 = _quantize_per_out_channel(w2_f32)
    x = x_f32.astype(jnp.bfloat16)

    y = projection_head(x, w1_q, s1, b1, w2_q, s2, b2)
    y = jax.block_until_ready(y)

    # Reference with identical numerics (bf16 MXU operands, f32 accumulation,
    # per-channel scale applied post-dot) so the comparison is tight.
    h_ref = jnp.maximum(
        jnp.dot(x, w1_q.astype(jnp.bfloat16),
                preferred_element_type=jnp.float32) * s1 + b1, 0.0)
    ref = jnp.dot(h_ref.astype(jnp.bfloat16), w2_q.astype(jnp.bfloat16),
                  preferred_element_type=jnp.float32) * s2 + b2

    assert y.shape == (BATCH, OUT_DIM)
    assert y.dtype == jnp.float32
    assert jnp.allclose(y, ref, atol=1e-2, rtol=1e-2)

    print("KERNEL_OK")
</pallas_src>

<mosaic_0001>
module attributes {stable_mosaic.version = 11 : i64} {
  func.func @_mlp_kernel(%arg0: i32, %arg1: memref<2x512xbf16, #tpu.memory_space<vmem>>, %arg2: memref<512x2048xi8, #tpu.memory_space<vmem>>, %arg3: memref<1x2048xf32, #tpu.memory_space<vmem>>, %arg4: memref<1x2048xf32, #tpu.memory_space<vmem>>, %arg5: memref<2048x128xi8, #tpu.memory_space<vmem>>, %arg6: memref<1x128xf32, #tpu.memory_space<vmem>>, %arg7: memref<1x128xf32, #tpu.memory_space<vmem>>, %arg8: memref<2x128xf32, #tpu.memory_space<vmem>>) attributes {dimension_semantics = [#tpu.dimension_semantics<arbitrary>], iteration_bounds = array<i64: 1>, scalar_prefetch = 0 : i64, scratch_operands = 0 : i64, tpu.core_type = #tpu.core_type<tc>, window_params = [{pipeline_mode = #tpu.pipeline_mode<synchronous>, transform_indices = @transform_0, window_bounds = array<i64: 2, 512>}, {transform_indices = @transform_1, window_bounds = array<i64: 512, 2048>}, {transform_indices = @transform_2, window_bounds = array<i64: 1, 2048>}, {transform_indices = @transform_3, window_bounds = array<i64: 1, 2048>}, {transform_indices = @transform_4, window_bounds = array<i64: 2048, 128>}, {pipeline_mode = #tpu.pipeline_mode<synchronous>, transform_indices = @transform_5, window_bounds = array<i64: 1, 128>}, {pipeline_mode = #tpu.pipeline_mode<synchronous>, transform_indices = @transform_6, window_bounds = array<i64: 1, 128>}, {pipeline_mode = #tpu.pipeline_mode<synchronous>, transform_indices = @transform_7, window_bounds = array<i64: 2, 128>}]} {
    %c0_i32 = arith.constant 0 : i32
    %0 = arith.cmpi eq, %arg0, %c0_i32 : i32
    %1 = arith.extui %0 : i1 to i32
    %c0_i32_0 = arith.constant 0 : i32
    %2 = arith.cmpi ne, %1, %c0_i32_0 : i32
    scf.if %2 {
      %c0_18 = arith.constant 0 : index
      %c0_19 = arith.constant 0 : index
      %25 = vector.load %arg7[%c0_18, %c0_19] : memref<1x128xf32, #tpu.memory_space<vmem>>, vector<1x128xf32>
      %26 = vector.shape_cast %25 : vector<1x128xf32> to vector<1x128xf32>
      %27 = vector.broadcast %26 : vector<1x128xf32> to vector<2x128xf32>
      %c0_20 = arith.constant 0 : index
      %c0_21 = arith.constant 0 : index
      %28 = vector.load %arg8[%c0_20, %c0_21] : memref<2x128xf32, #tpu.memory_space<vmem>>, vector<2x128xf32>
      tpu.vector_store %arg8[%c0_20, %c0_21], %27 {strides = array<i32>} : memref<2x128xf32, #tpu.memory_space<vmem>>, vector<2x128xf32>,
    } else {
    }
    %c0 = arith.constant 0 : index
    %c0_1 = arith.constant 0 : index
    %3 = vector.load %arg2[%c0, %c0_1] : memref<512x2048xi8, #tpu.memory_space<vmem>>, vector<512x2048xi8>
    %4 = arith.sitofp %3 : vector<512x2048xi8> to vector<512x2048xbf16>
    %c0_2 = arith.constant 0 : index
    %c0_3 = arith.constant 0 : index
    %5 = vector.load %arg1[%c0_2, %c0_3] : memref<2x512xbf16, #tpu.memory_space<vmem>>, vector<2x512xbf16>
    %cst = arith.constant dense<0.000000e+00> : vector<2x2048xf32>
    %6 = tpu.matmul %5, %4, %cst {dimension_numbers = #tpu.dot_dimension_numbers<[1], [0], [0], [1], [0, 0, 1, 1], [], []>} : vector<2x512xbf16>, vector<512x2048xbf16>, vector<2x2048xf32> -> vector<2x2048xf32>
    %c0_4 = arith.constant 0 : index
    %c0_5 = arith.constant 0 : index
    %7 = vector.load %arg3[%c0_4, %c0_5] : memref<1x2048xf32, #tpu.memory_space<vmem>>, vector<1x2048xf32>
    %8 = vector.broadcast %7 : vector<1x2048xf32> to vector<2x2048xf32>
    %9 = arith.mulf %6, %8 : vector<2x2048xf32>
    %c0_6 = arith.constant 0 : index
    %c0_7 = arith.constant 0 : index
    %10 = vector.load %arg4[%c0_6, %c0_7] : memref<1x2048xf32, #tpu.memory_space<vmem>>, vector<1x2048xf32>
    %11 = vector.broadcast %10 : vector<1x2048xf32> to vector<2x2048xf32>
    %12 = arith.addf %9, %11 : vector<2x2048xf32>
    %cst_8 = arith.constant 0.000000e+00 : f32
    %13 = vector.broadcast %cst_8 : f32 to vector<2x2048xf32>
    %14 = arith.maximumf %12, %13 : vector<2x2048xf32>
    %c0_9 = arith.constant 0 : index
    %c0_10 = arith.constant 0 : index
    %15 = vector.load %arg5[%c0_9, %c0_10] : memref<2048x128xi8, #tpu.memory_space<vmem>>, vector<2048x128xi8>
    %16 = arith.sitofp %15 : vector<2048x128xi8> to vector<2048x128xbf16>
    %17 = arith.truncf %14 : vector<2x2048xf32> to vector<2x2048xbf16>
    %cst_11 = arith.constant dense<0.000000e+00> : vector<2x128xf32>
    %18 = tpu.matmul %17, %16, %cst_11 {dimension_numbers = #tpu.dot_dimension_numbers<[1], [0], [0], [1], [0, 0, 1, 1], [], []>} : vector<2x2048xbf16>, vector<2048x128xbf16>, vector<2x128xf32> -> vector<2x128xf32>
    %c0_12 = arith.constant 0 : index
    %c0_13 = arith.constant 0 : index
    %19 = vector.load %arg8[%c0_12, %c0_13] : memref<2x128xf32, #tpu.memory_space<vmem>>, vector<2x128xf32>
    %c0_14 = arith.constant 0 : index
    %c0_15 = arith.constant 0 : index
    %20 = vector.load %arg6[%c0_14, %c0_15] : memref<1x128xf32, #tpu.memory_space<vmem>>, vector<1x128xf32>
    %21 = vector.broadcast %20 : vector<1x128xf32> to vector<2x128xf32>
    %22 = arith.mulf %18, %21 : vector<2x128xf32>
    %23 = arith.addf %19, %22 : vector<2x128xf32>
    %c0_16 = arith.constant 0 : index
    %c0_17 = arith.constant 0 : index
    %24 = vector.load %arg8[%c0_16, %c0_17] : memref<2x128xf32, #tpu.memory_space<vmem>>, vector<2x128xf32>
    tpu.vector_store %arg8[%c0_16, %c0_17], %23 {strides = array<i32>} : memref<2x128xf32, #tpu.memory_space<vmem>>, vector<2x128xf32>,
    return
  }
  func.func @transform_0(%arg0: i32) -> (i32, i32) {
    %c0_i32 = arith.constant 0 : i32
    %c0_i32_0 = arith.constant 0 : i32
    %c0_i32_1 = arith.constant 0 : i32
    return %c0_i32, %c0_i32_0 : i32, i32
  }
  func.func @transform_1(%arg0: i32) -> (i32, i32) {
    %c0_i32 = arith.constant 0 : i32
    %c0_i32_0 = arith.constant 0 : i32
    return %c0_i32, %arg0 : i32, i32
  }
  func.func @transform_2(%arg0: i32) -> (i32, i32) {
    %c0_i32 = arith.constant 0 : i32
    %c0_i32_0 = arith.constant 0 : i32
    return %c0_i32, %arg0 : i32, i32
  }
  func.func @transform_3(%arg0: i32) -> (i32, i32) {
    %c0_i32 = arith.constant 0 : i32
    %c0_i32_0 = arith.constant 0 : i32
    return %c0_i32, %arg0 : i32, i32
  }
  func.func @transform_4(%arg0: i32) -> (i32, i32) {
    %c0_i32 = arith.constant 0 : i32
    %c0_i32_0 = arith.constant 0 : i32
    return %arg0, %c0_i32 : i32, i32
  }
  func.func @transform_5(%arg0: i32) -> (i32, i32) {
    %c0_i32 = arith.constant 0 : i32
    %c0_i32_0 = arith.constant 0 : i32
    %c0_i32_1 = arith.constant 0 : i32
    return %c0_i32, %c0_i32_0 : i32, i32
  }
  func.func @transform_6(%arg0: i32) -> (i32, i32) {
    %c0_i32 = arith.constant 0 : i32
    %c0_i32_0 = arith.constant 0 : i32
    %c0_i32_1 = arith.constant 0 : i32
    return %c0_i32, %c0_i32_0 : i32, i32
  }
  func.func @transform_7(%arg0: i32) -> (i32, i32) {
    %c0_i32 = arith.constant 0 : i32
    %c0_i32_0 = arith.constant 0 : i32
    %c0_i32_1 = arith.constant 0 : i32
    return %c0_i32, %c0_i32_0 : i32, i32
  }
}

</mosaic_0001>

<llo_original>
// kernel: tpu_custom_call.1
$region0: #{tpu_custom_call.1}
  #allocation0 [shape = 'u32[]', space=smem, size = 0x4, offset = 0x4, fixed_abs, tag = 'smem constant byte address 0x4 - core index']
  #allocation1 [shape = 'u32[144,128]{1,0:T(1,128)}', space=vmem, size = 0x12000, scoped, tag = 'internal scratch']
  %s0 = inlined_call_operand.hbm [shape: bf16[2,512], index: 0, kind: input, shape index: {}]
  %s1 = inlined_call_operand.hbm [shape: s8[512,2048], index: 1, kind: input, shape index: {}]
  %s2 = inlined_call_operand.hbm [shape: f32[1,2048], index: 2, kind: input, shape index: {}]
  %s3 = inlined_call_operand.hbm [shape: f32[1,2048], index: 3, kind: input, shape index: {}]
  %s4 = inlined_call_operand.hbm [shape: s8[2048,128], index: 4, kind: input, shape index: {}]
  %s5 = inlined_call_operand.vmem [shape: f32[1,128], index: 5, kind: input, shape index: {}]
  %s6 = inlined_call_operand.vmem [shape: f32[1,128], index: 6, kind: input, shape index: {}]
  %s7 = inlined_call_operand.hbm [shape: f32[2,128], index: 7, kind: output, shape index: {}]
  %s8 = sld [smem:[#allocation0]]
  $region62: #{tpu_custom_call.1} parent=0
    _
  %s10 = ssub.s32 1, %s8
  %s11 = scalar_select 0, %s10, %s8
  $region1: #{tpu_custom_call.1} parent=0
    #allocation2 [shape = 'u8[2048]{0}', space=vmem, size = 0x800, scoped, tag = 'input window, operand 0, single buffered']
    #allocation3 [shape = 's32[1]{0}', space=sflag, size = 0x4, scoped, tag = 'scoped memory for tpu_custom_call.1']
    #allocation4 [shape = 's32[1]{0}', space=sflag, size = 0x4, scoped, tag = 'scoped memory for tpu_custom_call.1']
    #allocation5 [shape = 'u8[1048576]{0}', space=vmem, size = 0x100000, scoped, tag = 'input window, operand 1, single buffered']
    #allocation6 [shape = 's32[1]{0}', space=sflag, size = 0x4, scoped, tag = 'scoped memory for tpu_custom_call.1']
    #allocation7 [shape = 'u8[8192]{0}', space=vmem, size = 0x2000, scoped, tag = 'input window, operand 2, single buffered']
    #allocation8 [shape = 'u8[8192]{0}', space=vmem, size = 0x2000, scoped, tag = 'input window, operand 3, single buffered']
    #allocation9 [shape = 's32[1]{0}', space=sflag, size = 0x4, scoped, tag = 'scoped memory for tpu_custom_call.1']
    #allocation10 [shape = 'u8[262144]{0}', space=vmem, size = 0x40000, scoped, tag = 'input window, operand 4, single buffered']
    #allocation11 [shape = 'u8[1024]{0}', space=vmem, size = 0x400, scoped, tag = 'output window, operand 0, single buffered']
    %12 = vsyncpa [#allocation3], 0
    %13 = vsyncpa [#allocation6], 0
    %14 = vsyncpa [#allocation9], 0
    %15 = vsyncpa [#allocation4], 0
    // Predicated region
    $region2: #{tpu_custom_call.1} parent=1 // pred_check
      _
    $region3: #{tpu_custom_call.1} parent=1 // pred_check_branch
      %17 = sbr.rel (0) target = $region5
    $region4: #{tpu_custom_call.1} parent=1 // pred_region
      %s19 = ssub.s32 64, 64
      %20 = vsyncadd [#allocation3], %s19
      %s22 = sshll.u32 [#allocation2], 4
      %s23 = int_to_ptr.vmem [resolvable:$true] %s22
      %25 = dma.hbm_to_vmem [thread:$0]  %s0, 64, %s23, [#allocation3]
    $region5: #{tpu_custom_call.1} parent=1 // pred_fallthru
      _
    // Predicated region
    $region6: #{tpu_custom_call.1} parent=1 // pred_check
      _
    $region7: #{tpu_custom_call.1} parent=1 // pred_check_branch
      %27 = sbr.rel (0) target = $region9
    $region8: #{tpu_custom_call.1} parent=1 // pred_region
      %s29 = ssub.s32 32768, 32768
      %30 = vsyncadd [#allocation6], %s29
      %s31 = sshll.u32 [#allocation5], 4
      %s32 = int_to_ptr.vmem [resolvable:$true] %s31
      %37 = dma.hbm_to_vmem [thread:$0]  %s1, 32768, %s32, [#allocation6], 2048, 2048, 128
    $region9: #{tpu_custom_call.1} parent=1 // pred_fallthru
      _
    // Predicated region
    $region10: #{tpu_custom_call.1} parent=1 // pred_check
      _
    $region11: #{tpu_custom_call.1} parent=1 // pred_check_branch
      %39 = sbr.rel (0) target = $region13
    $region12: #{tpu_custom_call.1} parent=1 // pred_region
      %s41 = ssub.s32 256, 256
      %42 = vsyncadd [#allocation6], %s41
      %s44 = sshll.u32 [#allocation7], 4
      %s45 = int_to_ptr.vmem [resolvable:$true] %s44
      %47 = dma.hbm_to_vmem [thread:$0]  %s2, 256, %s45, [#allocation6]
    $region13: #{tpu_custom_call.1} parent=1 // pred_fallthru
      _
    // Predicated region
    $region14: #{tpu_custom_call.1} parent=1 // pred_check
      _
    $region15: #{tpu_custom_call.1} parent=1 // pred_check_branch
      %49 = sbr.rel (0) target = $region17
    $region16: #{tpu_custom_call.1} parent=1 // pred_region
      %s51 = ssub.s32 256, 256
      %52 = vsyncadd [#allocation9], %s51
      %s54 = sshll.u32 [#allocation8], 4
      %s55 = int_to_ptr.vmem [resolvable:$true] %s54
      %57 = dma.hbm_to_vmem [thread:$0]  %s3, 256, %s55, [#allocation9]
    $region17: #{tpu_custom_call.1} parent=1 // pred_fallthru
      _
    // Predicated region
    $region18: #{tpu_custom_call.1} parent=1 // pred_check
      _
    $region19: #{tpu_custom_call.1} parent=1 // pred_check_branch
      %59 = sbr.rel (0) target = $region21
    $region20: #{tpu_custom_call.1} parent=1 // pred_region
      %s61 = ssub.s32 8192, 8192
      %62 = vsyncadd [#allocation9], %s61
      %s63 = sshll.u32 [#allocation10], 4
      %s64 = int_to_ptr.vmem [resolvable:$true] %s63
      %69 = dma.hbm_to_vmem [thread:$0]  %s4, 8192, %s64, [#allocation9], 128, 128, 8
    $region21: #{tpu_custom_call.1} parent=1 // pred_fallthru
      _
    // Predicated region
    $region22: #{tpu_custom_call.1} parent=1 // pred_check
      _
    $region23: #{tpu_custom_call.1} parent=1 // pred_check_branch
      %71 = sbr.rel (0) target = $region25
    $region24: #{tpu_custom_call.1} parent=1 // pred_region
      _
    $region25: #{tpu_custom_call.1} parent=1 // pred_fallthru
      _
    // Predicated region
    $region26: #{tpu_custom_call.1} parent=1 // pred_check
      _
    $region27: #{tpu_custom_call.1} parent=1 // pred_check_branch
      %73 = sbr.rel (0) target = $region29
    $region28: #{tpu_custom_call.1} parent=1 // pred_region
      _
    $region29: #{tpu_custom_call.1} parent=1 // pred_fallthru
      _
    // Predicated region
    $region30: #{tpu_custom_call.1} parent=1 // pred_check
      _
    $region31: #{tpu_custom_call.1} parent=1 // pred_check_branch
      %75 = sbr.rel (0) target = $region33
    $region32: #{tpu_custom_call.1} parent=1 // pred_region
      %76 = dma.done [#allocation3], 64
    $region33: #{tpu_custom_call.1} parent=1 // pred_fallthru
      _
    // Predicated region
    $region34: #{tpu_custom_call.1} parent=1 // pred_check
      _
    $region35: #{tpu_custom_call.1} parent=1 // pred_check_branch
      %78 = sbr.rel (0) target = $region37
    $region36: #{tpu_custom_call.1} parent=1 // pred_region
      %79 = dma.done [#allocation6], 32768
    $region37: #{tpu_custom_call.1} parent=1 // pred_fallthru
      _
    // Predicated region
    $region38: #{tpu_custom_call.1} parent=1 // pred_check
      _
    $region39: #{tpu_custom_call.1} parent=1 // pred_check_branch
      %81 = sbr.rel (0) target = $region41
    $region40: #{tpu_custom_call.1} parent=1 // pred_region
      %82 = dma.done [#allocation6], 256
    $region41: #{tpu_custom_call.1} parent=1 // pred_fallthru
      _
    // Predicated region
    $region42: #{tpu_custom_call.1} parent=1 // pred_check
      _
    $region43: #{tpu_custom_call.1} parent=1 // pred_check_branch
      %84 = sbr.rel (0) target = $region45
    $region44: #{tpu_custom_call.1} parent=1 // pred_region
      %85 = dma.done [#allocation9], 256
    $region45: #{tpu_custom_call.1} parent=1 // pred_fallthru
      _
    // Predicated region
    $region46: #{tpu_custom_call.1} parent=1 // pred_check
      _
    $region47: #{tpu_custom_call.1} parent=1 // pred_check_branch
      %87 = sbr.rel (0) target = $region49
    $region48: #{tpu_custom_call.1} parent=1 // pred_region
      %88 = dma.done [#allocation9], 8192
    $region49: #{tpu_custom_call.1} parent=1 // pred_fallthru
      _
    %p90 = scmp.eq.s32.totalorder 0, 0
    // Predicated region
    $region50: #{tpu_custom_call.1} parent=1 // pred_check
      %p91 = pneg %p90
    $region51: #{tpu_custom_call.1} parent=1 // pred_check_branch
      %93 = sbr.rel (%p91) target = $region53
    $region52: #{tpu_custom_call.1} parent=1 // pred_region
      %v94 = vld [vmem:[%s6] sm:$0x1]
      %v96 = vlaneseq
      %v97 = vshrl.u32 %v96, 7
      %v98 = vsub.s32 0, %v97
      %v99 = vrot.slane %v94, %v98
      %101 = vst [vmem:[#allocation11] sm:$0x3] %v99
    $region53: #{tpu_custom_call.1} parent=1 // pred_fallthru
      _
    %v102 = vld [vmem:[#allocation5] sm:$0xff]
    %v103 = vld [vmem:[#allocation5 + $0x8] sm:$0xff]
    %v104 = vld [vmem:[#allocation5 + $0x10] sm:$0xff]
    %v105 = vld [vmem:[#allocation5 + $0x18] sm:$0xff]
    %v106 = vld [vmem:[#allocation5 + $0x20] sm:$0xff]
    %v107 = vld [vmem:[#allocation5 + $0x28] sm:$0xff]
    %v108 = vld [vmem:[#allocation5 + $0x30] sm:$0xff]
    %v109 = vld [vmem:[#allocation5 + $0x38] sm:$0xff]
    %v110 = vld [vmem:[#allocation5 + $0x40] sm:$0xff]
    %v111 = vld [vmem:[#allocation5 + $0x48] sm:$0xff]
    %v112 = vld [vmem:[#allocation5 + $0x50] sm:$0xff]
    %v113 = vld [vmem:[#allocation5 + $0x58] sm:$0xff]
    %v114 = vld [vmem:[#allocation5 + $0x60] sm:$0xff]
    %v115 = vld [vmem:[#allocation5 + $0x68] sm:$0xff]
    %v116 = vld [vmem:[#allocation5 + $0x70] sm:$0xff]
    %v117 = vld [vmem:[#allocation5 + $0x78] sm:$0xff]
    %v118 = vld [vmem:[#allocation5 + $0x80] sm:$0xff]
    %v119 = vld [vmem:[#allocation5 + $0x88] sm:$0xff]
    %v120 = vld [vmem:[#allocation5 + $0x90] sm:$0xff]
    %v121 = vld [vmem:[#allocation5 + $0x98] sm:$0xff]
    %v122 = vld [vmem:[#allocation5 + $0xa0] sm:$0xff]
    %v123 = vld [vmem:[#allocation5 + $0xa8] sm:$0xff]
    %v124 = vld [vmem:[#allocation5 + $0xb0] sm:$0xff]
    %v125 = vld [vmem:[#allocation5 + $0xb8] sm:$0xff]
    %v126 = vld [vmem:[#allocation5 + $0xc0] sm:$0xff]
    %v127 = vld [vmem:[#allocation5 + $0xc8] sm:$0xff]
    %v128 = vld [vmem:[#allocation5 + $0xd0] sm:$0xff]
    %v129 = vld [vmem:[#allocation5 + $0xd8] sm:$0xff]
    %v130 = vld [vmem:[#allocation5 + $0xe0] sm:$0xff]
    %v131 = vld [vmem:[#allocation5 + $0xe8] sm:$0xff]
    %v132 = vld [vmem:[#allocation5 + $0xf0] sm:$0xff]
    %v133 = vld [vmem:[#allocation5 + $0xf8] sm:$0xff]
    %v134 = vld [vmem:[#allocation5 + $0x100] sm:$0xff]
    %v135 = vld [vmem:[#allocation5 + $0x108] sm:$0xff]
    %v136 = vld [vmem:[#allocation5 + $0x110] sm:$0xff]
    %v137 = vld [vmem:[#allocation5 + $0x118] sm:$0xff]
    %v138 = vld [vmem:[#allocation5 + $0x120] sm:$0xff]
    %v139 = vld [vmem:[#allocation5 + $0x128] sm:$0xff]
    %v140 = vld [vmem:[#allocation5 + $0x130] sm:$0xff]
    %v141 = vld [vmem:[#allocation5 + $0x138] sm:$0xff]
    %v142 = vld [vmem:[#allocation5 + $0x140] sm:$0xff]
    %v143 = vld [vmem:[#allocation5 + $0x148] sm:$0xff]
    %v144 = vld [vmem:[#allocation5 + $0x150] sm:$0xff]
    %v145 = vld [vmem:[#allocation5 + $0x158] sm:$0xff]
    %v146 = vld [vmem:[#allocation5 + $0x160] sm:$0xff]
    %v147 = vld [vmem:[#allocation5 + $0x168] sm:$0xff]
    %v148 = vld [vmem:[#allocation5 + $0x170] sm:$0xff]
    %v149 = vld [vmem:[#allocation5 + $0x178] sm:$0xff]
    %v150 = vld [vmem:[#allocation5 + $0x180] sm:$0xff]
    %v151 = vld [vmem:[#allocation5 + $0x188] sm:$0xff]
    %v152 = vld [vmem:[#allocation5 + $0x190] sm:$0xff]
    %v153 = vld [vmem:[#allocation5 + $0x198] sm:$0xff]
    %v154 = vld [vmem:[#allocation5 + $0x1a0] sm:$0xff]
    %v155 = vld [vmem:[#allocation5 + $0x1a8] sm:$0xff]
    %v156 = vld [vmem:[#allocation5 + $0x1b0] sm:$0xff]
    %v157 = vld [vmem:[#allocation5 + $0x1b8] sm:$0xff]
    %v158 = vld [vmem:[#allocation5 + $0x1c0] sm:$0xff]
    %v159 = vld [vmem:[#allocation5 + $0x1c8] sm:$0xff]
    %v160 = vld [vmem:[#allocation5 + $0x1d0] sm:$0xff]
    %v161 = vld [vmem:[#allocation5 + $0x1d8] sm:$0xff]
    %v162 = vld [vmem:[#allocation5 + $0x1e0] sm:$0xff]
    %v163 = vld [vmem:[#allocation5 + $0x1e8] sm:$0xff]
    %v164 = vld [vmem:[#allocation5 + $0x1f0] sm:$0xff]
    %v165 = vld [vmem:[#allocation5 + $0x1f8] sm:$0xff]
    %v166 = vld [vmem:[#allocation5 + $0x200] sm:$0xff]
    %v167 = vld [vmem:[#allocation5 + $0x208] sm:$0xff]
    %v168 = vld [vmem:[#allocation5 + $0x210] sm:$0xff]
    %v169 = vld [vmem:[#allocation5 + $0x218] sm:$0xff]
    %v170 = vld [vmem:[#allocation5 + $0x220] sm:$0xff]
    %v171 = vld [vmem:[#allocation5 + $0x228] sm:$0xff]
    %v172 = vld [vmem:[#allocation5 + $0x230] sm:$0xff]
    %v173 = vld [vmem:[#allocation5 + $0x238] sm:$0xff]
    %v174 = vld [vmem:[#allocation5 + $0x240] sm:$0xff]
    %v175 = vld [vmem:[#allocation5 + $0x248] sm:$0xff]
    %v176 = vld [vmem:[#allocation5 + $0x250] sm:$0xff]
    %v177 = vld [vmem:[#allocation5 + $0x258] sm:$0xff]
    %v178 = vld [vmem:[#allocation5 + $0x260] sm:$0xff]
    %v179 = vld [vmem:[#allocation5 + $0x268] sm:$0xff]
    %v180 = vld [vmem:[#allocation5 + $0x270] sm:$0xff]
    %v181 = vld [vmem:[#allocation5 + $0x278] sm:$0xff]
    %v182 = vld [vmem:[#allocation5 + $0x280] sm:$0xff]
    %v183 = vld [vmem:[#allocation5 + $0x288] sm:$0xff]
    %v184 = vld [vmem:[#allocation5 + $0x290] sm:$0xff]
    %v185 = vld [vmem:[#allocation5 + $0x298] sm:$0xff]
    %v186 = vld [vmem:[#allocation5 + $0x2a0] sm:$0xff]
    %v187 = vld [vmem:[#allocation5 + $0x2a8] sm:$0xff]
    %v188 = vld [vmem:[#allocation5 + $0x2b0] sm:$0xff]
    %v189 = vld [vmem:[#allocation5 + $0x2b8] sm:$0xff]
    %v190 = vld [vmem:[#allocation5 + $0x2c0] sm:$0xff]
    %v191 = vld [vmem:[#allocation5 + $0x2c8] sm:$0xff]
    %v192 = vld [vmem:[#allocation5 + $0x2d0] sm:$0xff]
    %v193 = vld [vmem:[#allocation5 + $0x2d8] sm:$0xff]
    %v194 = vld [vmem:[#allocation5 + $0x2e0] sm:$0xff]
    %v195 = vld [vmem:[#allocation5 + $0x2e8] sm:$0xff]
    %v196 = vld [vmem:[#allocation5 + $0x2f0] sm:$0xff]
    %v197 = vld [vmem:[#allocation5 + $0x2f8] sm:$0xff]
    %v198 = vld [vmem:[#allocation5 + $0x300] sm:$0xff]
    %v199 = vld [vmem:[#allocation5 + $0x308] sm:$0xff]
    %v200 = vld [vmem:[#allocation5 + $0x310] sm:$0xff]
    %v201 = vld [vmem:[#allocation5 + $0x318] sm:$0xff]
    %v202 = vld [vmem:[#allocation5 + $0x320] sm:$0xff]
    %v203 = vld [vmem:[#allocation5 + $0x328] sm:$0xff]
    %v204 = vld [vmem:[#allocation5 + $0x330] sm:$0xff]
    %v205 = vld [vmem:[#allocation5 + $0x338] sm:$0xff]
    %v206 = vld [vmem:[#allocation5 + $0x340] sm:$0xff]
    %v207 = vld [vmem:[#allocation5 + $0x348] sm:$0xff]
    %v208 = vld [vmem:[#allocation5 + $0x350] sm:$0xff]
    %v209 = vld [vmem:[#allocation5 + $0x358] sm:$0xff]
    %v210 = vld [vmem:[#allocation5 + $0x360] sm:$0xff]
    %v211 = vld [vmem:[#allocation5 + $0x368] sm:$0xff]
    %v212 = vld [vmem:[#allocation5 + $0x370] sm:$0xff]
    %v213 = vld [vmem:[#allocation5 + $0x378] sm:$0xff]
    %v214 = vld [vmem:[#allocation5 + $0x380] sm:$0xff]
    %v215 = vld [vmem:[#allocation5 + $0x388] sm:$0xff]
    %v216 = vld [vmem:[#allocation5 + $0x390] sm:$0xff]
    %v217 = vld [vmem:[#allocation5 + $0x398] sm:$0xff]
    %v218 = vld [vmem:[#allocation5 + $0x3a0] sm:$0xff]
    %v219 = vld [vmem:[#allocation5 + $0x3a8] sm:$0xff]
    %v220 = vld [vmem:[#allocation5 + $0x3b0] sm:$0xff]
    %v221 = vld [vmem:[#allocation5 + $0x3b8] sm:$0xff]
    %v222 = vld [vmem:[#allocation5 + $0x3c0] sm:$0xff]
    %v223 = vld [vmem:[#allocation5 + $0x3c8] sm:$0xff]
    %v224 = vld [vmem:[#allocation5 + $0x3d0] sm:$0xff]
    %v225 = vld [vmem:[#allocation5 + $0x3d8] sm:$0xff]
    %v226 = vld [vmem:[#allocation5 + $0x3e0] sm:$0xff]
    %v227 = vld [vmem:[#allocation5 + $0x3e8] sm:$0xff]
    %v228 = vld [vmem:[#allocation5 + $0x3f0] sm:$0xff]
    %v229 = vld [vmem:[#allocation5 + $0x3f8] sm:$0xff]
    %v230 = vld [vmem:[#allocation5 + $0x400] sm:$0xff]
    %v231 = vld [vmem:[#allocation5 + $0x408] sm:$0xff]
    %v232 = vld [vmem:[#allocation5 + $0x410] sm:$0xff]
    %v233 = vld [vmem:[#allocation5 + $0x418] sm:$0xff]
    %v234 = vld [vmem:[#allocation5 + $0x420] sm:$0xff]
    %v235 = vld [vmem:[#allocation5 + $0x428] sm:$0xff]
    %v236 = vld [vmem:[#allocation5 + $0x430] sm:$0xff]
    %v237 = vld [vmem:[#allocation5 + $0x438] sm:$0xff]
    %v238 = vld [vmem:[#allocation5 + $0x440] sm:$0xff]
    %v239 = vld [vmem:[#allocation5 + $0x448] sm:$0xff]
    %v240 = vld [vmem:[#allocation5 + $0x450] sm:$0xff]
    %v241 = vld [vmem:[#allocation5 + $0x458] sm:$0xff]
    %v242 = vld [vmem:[#allocation5 + $0x460] sm:$0xff]
    %v243 = vld [vmem:[#allocation5 + $0x468] sm:$0xff]
    %v244 = vld [vmem:[#allocation5 + $0x470] sm:$0xff]
    %v245 = vld [vmem:[#allocation5 + $0x478] sm:$0xff]
    %v246 = vld [vmem:[#allocation5 + $0x480] sm:$0xff]
    %v247 = vld [vmem:[#allocation5 + $0x488] sm:$0xff]
    %v248 = vld [vmem:[#allocation5 + $0x490] sm:$0xff]
    %v249 = vld [vmem:[#allocation5 + $0x498] sm:$0xff]
    %v250 = vld [vmem:[#allocation5 + $0x4a0] sm:$0xff]
    %v251 = vld [vmem:[#allocation5 + $0x4a8] sm:$0xff]
    %v252 = vld [vmem:[#allocation5 + $0x4b0] sm:$0xff]
    %v253 = vld [vmem:[#allocation5 + $0x4b8] sm:$0xff]
    %v254 = vld [vmem:[#allocation5 + $0x4c0] sm:$0xff]
    %v255 = vld [vmem:[#allocation5 + $0x4c8] sm:$0xff]
    %v256 = vld [vmem:[#allocation5 + $0x4d0] sm:$0xff]
    %v257 = vld [vmem:[#allocation5 + $0x4d8] sm:$0xff]
    %v258 = vld [vmem:[#allocation5 + $0x4e0] sm:$0xff]
    %v259 = vld [vmem:[#allocation5 + $0x4e8] sm:$0xff]
    %v260 = vld [vmem:[#allocation5 + $0x4f0] sm:$0xff]
    %v261 = vld [vmem:[#allocation5 + $0x4f8] sm:$0xff]
    %v262 = vld [vmem:[#allocation5 + $0x500] sm:$0xff]
    %v263 = vld [vmem:[#allocation5 + $0x508] sm:$0xff]
    %v264 = vld [vmem:[#allocation5 + $0x510] sm:$0xff]
    %v265 = vld [vmem:[#allocation5 + $0x518] sm:$0xff]
    %v266 = vld [vmem:[#allocation5 + $0x520] sm:$0xff]
    %v267 = vld [vmem:[#allocation5 + $0x528] sm:$0xff]
    %v268 = vld [vmem:[#allocation5 + $0x530] sm:$0xff]
    %v269 = vld [vmem:[#allocation5 + $0x538] sm:$0xff]
    %v270 = vld [vmem:[#allocation5 + $0x540] sm:$0xff]
    %v271 = vld [vmem:[#allocation5 + $0x548] sm:$0xff]
    %v272 = vld [vmem:[#allocation5 + $0x550] sm:$0xff]
    %v273 = vld [vmem:[#allocation5 + $0x558] sm:$0xff]
    %v274 = vld [vmem:[#allocation5 + $0x560] sm:$0xff]
    %v275 = vld [vmem:[#allocation5 + $0x568] sm:$0xff]
    %v276 = vld [vmem:[#allocation5 + $0x570] sm:$0xff]
    %v277 = vld [vmem:[#allocation5 + $0x578] sm:$0xff]
    %v278 = vld [vmem:[#allocation5 + $0x580] sm:$0xff]
    %v279 = vld [vmem:[#allocation5 + $0x588] sm:$0xff]
    %v280 = vld [vmem:[#allocation5 + $0x590] sm:$0xff]
    %v281 = vld [vmem:[#allocation5 + $0x598] sm:$0xff]
    %v282 = vld [vmem:[#allocation5 + $0x5a0] sm:$0xff]
    %v283 = vld [vmem:[#allocation5 + $0x5a8] sm:$0xff]
    %v284 = vld [vmem:[#allocation5 + $0x5b0] sm:$0xff]
    %v285 = vld [vmem:[#allocation5 + $0x5b8] sm:$0xff]
    %v286 = vld [vmem:[#allocation5 + $0x5c0] sm:$0xff]
    %v287 = vld [vmem:[#allocation5 + $0x5c8] sm:$0xff]
    %v288 = vld [vmem:[#allocation5 + $0x5d0] sm:$0xff]
    %v289 = vld [vmem:[#allocation5 + $0x5d8] sm:$0xff]
    %v290 = vld [vmem:[#allocation5 + $0x5e0] sm:$0xff]
    %v291 = vld [vmem:[#allocation5 + $0x5e8] sm:$0xff]
    %v292 = vld [vmem:[#allocation5 + $0x5f0] sm:$0xff]
    %v293 = vld [vmem:[#allocation5 + $0x5f8] sm:$0xff]
    %v294 = vld [vmem:[#allocation5 + $0x600] sm:$0xff]
    %v295 = vld [vmem:[#allocation5 + $0x608] sm:$0xff]
    %v296 = vld [vmem:[#allocation5 + $0x610] sm:$0xff]
    %v297 = vld [vmem:[#allocation5 + $0x618] sm:$0xff]
    %v298 = vld [vmem:[#allocation5 + $0x620] sm:$0xff]
    %v299 = vld [vmem:[#allocation5 + $0x628] sm:$0xff]
    %v300 = vld [vmem:[#allocation5 + $0x630] sm:$0xff]
    %v301 = vld [vmem:[#allocation5 + $0x638] sm:$0xff]
    %v302 = vld [vmem:[#allocation5 + $0x640] sm:$0xff]
    %v303 = vld [vmem:[#allocation5 + $0x648] sm:$0xff]
    %v304 = vld [vmem:[#allocation5 + $0x650] sm:$0xff]
    %v305 = vld [vmem:[#allocation5 + $0x658] sm:$0xff]
    %v306 = vld [vmem:[#allocation5 + $0x660] sm:$0xff]
    %v307 = vld [vmem:[#allocation5 + $0x668] sm:$0xff]
    %v308 = vld [vmem:[#allocation5 + $0x670] sm:$0xff]
    %v309 = vld [vmem:[#allocation5 + $0x678] sm:$0xff]
    %v310 = vld [vmem:[#allocation5 + $0x680] sm:$0xff]
    %v311 = vld [vmem:[#allocation5 + $0x688] sm:$0xff]
    %v312 = vld [vmem:[#allocation5 + $0x690] sm:$0xff]
    %v313 = vld [vmem:[#allocation5 + $0x698] sm:$0xff]
    %v314 = vld [vmem:[#allocation5 + $0x6a0] sm:$0xff]
    %v315 = vld [vmem:[#allocation5 + $0x6a8] sm:$0xff]
    %v316 = vld [vmem:[#allocation5 + $0x6b0] sm:$0xff]
    %v317 = vld [vmem:[#allocation5 + $0x6b8] sm:$0xff]
    %v318 = vld [vmem:[#allocation5 + $0x6c0] sm:$0xff]
    %v319 = vld [vmem:[#allocation5 + $0x6c8] sm:$0xff]
    %v320 = vld [vmem:[#allocation5 + $0x6d0] sm:$0xff]
    %v321 = vld [vmem:[#allocation5 + $0x6d8] sm:$0xff]
    %v322 = vld [vmem:[#allocation5 + $0x6e0] sm:$0xff]
    %v323 = vld [vmem:[#allocation5 + $0x6e8] sm:$0xff]
    %v324 = vld [vmem:[#allocation5 + $0x6f0] sm:$0xff]
    %v325 = vld [vmem:[#allocation5 + $0x6f8] sm:$0xff]
    %v326 = vld [vmem:[#allocation5 + $0x700] sm:$0xff]
    %v327 = vld [vmem:[#allocation5 + $0x708] sm:$0xff]
    %v328 = vld [vmem:[#allocation5 + $0x710] sm:$0xff]
    %v329 = vld [vmem:[#allocation5 + $0x718] sm:$0xff]
    %v330 = vld [vmem:[#allocation5 + $0x720] sm:$0xff]
    %v331 = vld [vmem:[#allocation5 + $0x728] sm:$0xff]
    %v332 = vld [vmem:[#allocation5 + $0x730] sm:$0xff]
    %v333 = vld [vmem:[#allocation5 + $0x738] sm:$0xff]
    %v334 = vld [vmem:[#allocation5 + $0x740] sm:$0xff]
    %v335 = vld [vmem:[#allocation5 + $0x748] sm:$0xff]
    %v336 = vld [vmem:[#allocation5 + $0x750] sm:$0xff]
    %v337 = vld [vmem:[#allocation5 + $0x758] sm:$0xff]
    %v338 = vld [vmem:[#allocation5 + $0x760] sm:$0xff]
    %v339 = vld [vmem:[#allocation5 + $0x768] sm:$0xff]
    %v340 = vld [vmem:[#allocation5 + $0x770] sm:$0xff]
    %v341 = vld [vmem:[#allocation5 + $0x778] sm:$0xff]
    %v342 = vld [vmem:[#allocation5 + $0x780] sm:$0xff]
    %v343 = vld [vmem:[#allocation5 + $0x788] sm:$0xff]
    %v344 = vld [vmem:[#allocation5 + $0x790] sm:$0xff]
    %v345 = vld [vmem:[#allocation5 + $0x798] sm:$0xff]
    %v346 = vld [vmem:[#allocation5 + $0x7a0] sm:$0xff]
    %v347 = vld [vmem:[#allocation5 + $0x7a8] sm:$0xff]
    %v348 = vld [vmem:[#allocation5 + $0x7b0] sm:$0xff]
    %v349 = vld [vmem:[#allocation5 + $0x7b8] sm:$0xff]
    %v350 = vld [vmem:[#allocation5 + $0x7c0] sm:$0xff]
    %v351 = vld [vmem:[#allocation5 + $0x7c8] sm:$0xff]
    %v352 = vld [vmem:[#allocation5 + $0x7d0] sm:$0xff]
    %v353 = vld [vmem:[#allocation5 + $0x7d8] sm:$0xff]
    %v354 = vld [vmem:[#allocation5 + $0x7e0] sm:$0xff]
    %v355 = vld [vmem:[#allocation5 + $0x7e8] sm:$0xff]
    %v356 = vld [vmem:[#allocation5 + $0x7f0] sm:$0xff]
    %v357 = vld [vmem:[#allocation5 + $0x7f8] sm:$0xff]
    %v358 = vunpack.c.l.s8.bf16 %v102
    %v359 = vunpack.c.l.s8.bf16 %v103
    %v360 = vunpack.c.l.s8.bf16 %v104
    %v361 = vunpack.c.l.s8.bf16 %v105
    %v362 = vunpack.c.l.s8.bf16 %v106
    %v363 = vunpack.c.l.s8.bf16 %v107
    %v364 = vunpack.c.l.s8.bf16 %v108
    %v365 = vunpack.c.l.s8.bf16 %v109
    %v366 = vunpack.c.l.s8.bf16 %v110
    %v367 = vunpack.c.l.s8.bf16 %v111
    %v368 = vunpack.c.l.s8.bf16 %v112
    %v369 = vunpack.c.l.s8.bf16 %v113
    %v370 = vunpack.c.l.s8.bf16 %v114
    %v371 = vunpack.c.l.s8.bf16 %v115
    %v372 = vunpack.c.l.s8.bf16 %v116
    %v373 = vunpack.c.l.s8.bf16 %v117
    %v374 = vunpack.c.h.s8.bf16 %v102
    %v375 = vunpack.c.h.s8.bf16 %v103
    %v376 = vunpack.c.h.s8.bf16 %v104
    %v377 = vunpack.c.h.s8.bf16 %v105
    %v378 = vunpack.c.h.s8.bf16 %v106
    %v379 = vunpack.c.h.s8.bf16 %v107
    %v380 = vunpack.c.h.s8.bf16 %v108
    %v381 = vunpack.c.h.s8.bf16 %v109
    %v382 = vunpack.c.h.s8.bf16 %v110
    %v383 = vunpack.c.h.s8.bf16 %v111
    %v384 = vunpack.c.h.s8.bf16 %v112
    %v385 = vunpack.c.h.s8.bf16 %v113
    %v386 = vunpack.c.h.s8.bf16 %v114
    %v387 = vunpack.c.h.s8.bf16 %v115
    %v388 = vunpack.c.h.s8.bf16 %v116
    %v389 = vunpack.c.h.s8.bf16 %v117
    %v390 = vunpack.c.l.s8.bf16 %v118
    %v391 = vunpack.c.l.s8.bf16 %v119
    %v392 = vunpack.c.l.s8.bf16 %v120
    %v393 = vunpack.c.l.s8.bf16 %v121
    %v394 = vunpack.c.l.s8.bf16 %v122
    %v395 = vunpack.c.l.s8.bf16 %v123
    %v396 = vunpack.c.l.s8.bf16 %v124
    %v397 = vunpack.c.l.s8.bf16 %v125
    %v398 = vunpack.c.l.s8.bf16 %v126
    %v399 = vunpack.c.l.s8.bf16 %v127
    %v400 = vunpack.c.l.s8.bf16 %v128
    %v401 = vunpack.c.l.s8.bf16 %v129
    %v402 = vunpack.c.l.s8.bf16 %v130
    %v403 = vunpack.c.l.s8.bf16 %v131
    %v404 = vunpack.c.l.s8.bf16 %v132
    %v405 = vunpack.c.l.s8.bf16 %v133
    %v406 = vunpack.c.h.s8.bf16 %v118
    %v407 = vunpack.c.h.s8.bf16 %v119
    %v408 = vunpack.c.h.s8.bf16 %v120
    %v409 = vunpack.c.h.s8.bf16 %v121
    %v410 = vunpack.c.h.s8.bf16 %v122
    %v411 = vunpack.c.h.s8.bf16 %v123
    %v412 = vunpack.c.h.s8.bf16 %v124
    %v413 = vunpack.c.h.s8.bf16 %v125
    %v414 = vunpack.c.h.s8.bf16 %v126
    %v415 = vunpack.c.h.s8.bf16 %v127
    %v416 = vunpack.c.h.s8.bf16 %v128
    %v417 = vunpack.c.h.s8.bf16 %v129
    %v418 = vunpack.c.h.s8.bf16 %v130
    %v419 = vunpack.c.h.s8.bf16 %v131
    %v420 = vunpack.c.h.s8.bf16 %v132
    %v421 = vunpack.c.h.s8.bf16 %v133
    %v422 = vunpack.c.l.s8.bf16 %v134
    %v423 = vunpack.c.l.s8.bf16 %v135
    %v424 = vunpack.c.l.s8.bf16 %v136
    %v425 = vunpack.c.l.s8.bf16 %v137
    %v426 = vunpack.c.l.s8.bf16 %v138
    %v427 = vunpack.c.l.s8.bf16 %v139
    %v428 = vunpack.c.l.s8.bf16 %v140
    %v429 = vunpack.c.l.s8.bf16 %v141
    %v430 = vunpack.c.l.s8.bf16 %v142
    %v431 = vunpack.c.l.s8.bf16 %v143
    %v432 = vunpack.c.l.s8.bf16 %v144
    %v433 = vunpack.c.l.s8.bf16 %v145
    %v434 = vunpack.c.l.s8.bf16 %v146
    %v435 = vunpack.c.l.s8.bf16 %v147
    %v436 = vunpack.c.l.s8.bf16 %v148
    %v437 = vunpack.c.l.s8.bf16 %v149
    %v438 = vunpack.c.h.s8.bf16 %v134
    %v439 = vunpack.c.h.s8.bf16 %v135
    %v440 = vunpack.c.h.s8.bf16 %v136
    %v441 = vunpack.c.h.s8.bf16 %v137
    %v442 = vunpack.c.h.s8.bf16 %v138
    %v443 = vunpack.c.h.s8.bf16 %v139
    %v444 = vunpack.c.h.s8.bf16 %v140
    %v445 = vunpack.c.h.s8.bf16 %v141
    %v446 = vunpack.c.h.s8.bf16 %v142
    %v447 = vunpack.c.h.s8.bf16 %v143
    %v448 = vunpack.c.h.s8.bf16 %v144
    %v449 = vunpack.c.h.s8.bf16 %v145
    %v450 = vunpack.c.h.s8.bf16 %v146
    %v451 = vunpack.c.h.s8.bf16 %v147
    %v452 = vunpack.c.h.s8.bf16 %v148
    %v453 = vunpack.c.h.s8.bf16 %v149
    %v454 = vunpack.c.l.s8.bf16 %v150
    %v455 = vunpack.c.l.s8.bf16 %v151
    %v456 = vunpack.c.l.s8.bf16 %v152
    %v457 = vunpack.c.l.s8.bf16 %v153
    %v458 = vunpack.c.l.s8.bf16 %v154
    %v459 = vunpack.c.l.s8.bf16 %v155
    %v460 = vunpack.c.l.s8.bf16 %v156
    %v461 = vunpack.c.l.s8.bf16 %v157
    %v462 = vunpack.c.l.s8.bf16 %v158
    %v463 = vunpack.c.l.s8.bf16 %v159
    %v464 = vunpack.c.l.s8.bf16 %v160
    %v465 = vunpack.c.l.s8.bf16 %v161
    %v466 = vunpack.c.l.s8.bf16 %v162
    %v467 = vunpack.c.l.s8.bf16 %v163
    %v468 = vunpack.c.l.s8.bf16 %v164
    %v469 = vunpack.c.l.s8.bf16 %v165
    %v470 = vunpack.c.h.s8.bf16 %v150
    %v471 = vunpack.c.h.s8.bf16 %v151
    %v472 = vunpack.c.h.s8.bf16 %v152
    %v473 = vunpack.c.h.s8.bf16 %v153
    %v474 = vunpack.c.h.s8.bf16 %v154
    %v475 = vunpack.c.h.s8.bf16 %v155
    %v476 = vunpack.c.h.s8.bf16 %v156
    %v477 = vunpack.c.h.s8.bf16 %v157
    %v478 = vunpack.c.h.s8.bf16 %v158
    %v479 = vunpack.c.h.s8.bf16 %v159
    %v480 = vunpack.c.h.s8.bf16 %v160
    %v481 = vunpack.c.h.s8.bf16 %v161
    %v482 = vunpack.c.h.s8.bf16 %v162
    %v483 = vunpack.c.h.s8.bf16 %v163
    %v484 = vunpack.c.h.s8.bf16 %v164
    %v485 = vunpack.c.h.s8.bf16 %v165
    %v486 = vunpack.c.l.s8.bf16 %v166
    %v487 = vunpack.c.l.s8.bf16 %v167
    %v488 = vunpack.c.l.s8.bf16 %v168
    %v489 = vunpack.c.l.s8.bf16 %v169
    %v490 = vunpack.c.l.s8.bf16 %v170
    %v491 = vunpack.c.l.s8.bf16 %v171
    %v492 = vunpack.c.l.s8.bf16 %v172
    %v493 = vunpack.c.l.s8.bf16 %v173
    %v494 = vunpack.c.l.s8.bf16 %v174
    %v495 = vunpack.c.l.s8.bf16 %v175
    %v496 = vunpack.c.l.s8.bf16 %v176
    %v497 = vunpack.c.l.s8.bf16 %v177
    %v498 = vunpack.c.l.s8.bf16 %v178
    %v499 = vunpack.c.l.s8.bf16 %v179
    %v500 = vunpack.c.l.s8.bf16 %v180
    %v501 = vunpack.c.l.s8.bf16 %v181
    %v502 = vunpack.c.h.s8.bf16 %v166
    %v503 = vunpack.c.h.s8.bf16 %v167
    %v504 = vunpack.c.h.s8.bf16 %v168
    %v505 = vunpack.c.h.s8.bf16 %v169
    %v506 = vunpack.c.h.s8.bf16 %v170
    %v507 = vunpack.c.h.s8.bf16 %v171
    %v508 = vunpack.c.h.s8.bf16 %v172
    %v509 = vunpack.c.h.s8.bf16 %v173
    %v510 = vunpack.c.h.s8.bf16 %v174
    %v511 = vunpack.c.h.s8.bf16 %v175
    %v512 = vunpack.c.h.s8.bf16 %v176
    %v513 = vunpack.c.h.s8.bf16 %v177
    %v514 = vunpack.c.h.s8.bf16 %v178
    %v515 = vunpack.c.h.s8.bf16 %v179
    %v516 = vunpack.c.h.s8.bf16 %v180
    %v517 = vunpack.c.h.s8.bf16 %v181
    %v518 = vunpack.c.l.s8.bf16 %v182
    %v519 = vunpack.c.l.s8.bf16 %v183
    %v520 = vunpack.c.l.s8.bf16 %v184
    %v521 = vunpack.c.l.s8.bf16 %v185
    %v522 = vunpack.c.l.s8.bf16 %v186
    %v523 = vunpack.c.l.s8.bf16 %v187
    %v524 = vunpack.c.l.s8.bf16 %v188
    %v525 = vunpack.c.l.s8.bf16 %v189
    %v526 = vunpack.c.l.s8.bf16 %v190
    %v527 = vunpack.c.l.s8.bf16 %v191
    %v528 = vunpack.c.l.s8.bf16 %v192
    %v529 = vunpack.c.l.s8.bf16 %v193
    %v530 = vunpack.c.l.s8.bf16 %v194
    %v531 = vunpack.c.l.s8.bf16 %v195
    %v532 = vunpack.c.l.s8.bf16 %v196
    %v533 = vunpack.c.l.s8.bf16 %v197
    %v534 = vunpack.c.h.s8.bf16 %v182
    %v535 = vunpack.c.h.s8.bf16 %v183
    %v536 = vunpack.c.h.s8.bf16 %v184
    %v537 = vunpack.c.h.s8.bf16 %v185
    %v538 = vunpack.c.h.s8.bf16 %v186
    %v539 = vunpack.c.h.s8.bf16 %v187
    %v540 = vunpack.c.h.s8.bf16 %v188
    %v541 = vunpack.c.h.s8.bf16 %v189
    %v542 = vunpack.c.h.s8.bf16 %v190
    %v543 = vunpack.c.h.s8.bf16 %v191
    %v544 = vunpack.c.h.s8.bf16 %v192
    %v545 = vunpack.c.h.s8.bf16 %v193
    %v546 = vunpack.c.h.s8.bf16 %v194
    %v547 = vunpack.c.h.s8.bf16 %v195
    %v548 = vunpack.c.h.s8.bf16 %v196
    %v549 = vunpack.c.h.s8.bf16 %v197
    %v550 = vunpack.c.l.s8.bf16 %v198
    %v551 = vunpack.c.l.s8.bf16 %v199
    %v552 = vunpack.c.l.s8.bf16 %v200
    %v553 = vunpack.c.l.s8.bf16 %v201
    %v554 = vunpack.c.l.s8.bf16 %v202
    %v555 = vunpack.c.l.s8.bf16 %v203
    %v556 = vunpack.c.l.s8.bf16 %v204
    %v557 = vunpack.c.l.s8.bf16 %v205
    %v558 = vunpack.c.l.s8.bf16 %v206
    %v559 = vunpack.c.l.s8.bf16 %v207
    %v560 = vunpack.c.l.s8.bf16 %v208
    %v561 = vunpack.c.l.s8.bf16 %v209
    %v562 = vunpack.c.l.s8.bf16 %v210
    %v563 = vunpack.c.l.s8.bf16 %v211
    %v564 = vunpack.c.l.s8.bf16 %v212
    %v565 = vunpack.c.l.s8.bf16 %v213
    %v566 = vunpack.c.h.s8.bf16 %v198
    %v567 = vunpack.c.h.s8.bf16 %v199
    %v568 = vunpack.c.h.s8.bf16 %v200
    %v569 = vunpack.c.h.s8.bf16 %v201
    %v570 = vunpack.c.h.s8.bf16 %v202
    %v571 = vunpack.c.h.s8.bf16 %v203
    %v572 = vunpack.c.h.s8.bf16 %v204
    %v573 = vunpack.c.h.s8.bf16 %v205
    %v574 = vunpack.c.h.s8.bf16 %v206
    %v575 = vunpack.c.h.s8.bf16 %v207
    %v576 = vunpack.c.h.s8.bf16 %v208
    %v577 = vunpack.c.h.s8.bf16 %v209
    %v578 = vunpack.c.h.s8.bf16 %v210
    %v579 = vunpack.c.h.s8.bf16 %v211
    %v580 = vunpack.c.h.s8.bf16 %v212
    %v581 = vunpack.c.h.s8.bf16 %v213
    %v582 = vunpack.c.l.s8.bf16 %v214
    %v583 = vunpack.c.l.s8.bf16 %v215
    %v584 = vunpack.c.l.s8.bf16 %v216
    %v585 = vunpack.c.l.s8.bf16 %v217
    %v586 = vunpack.c.l.s8.bf16 %v218
    %v587 = vunpack.c.l.s8.bf16 %v219
    %v588 = vunpack.c.l.s8.bf16 %v220
    %v589 = vunpack.c.l.s8.bf16 %v221
    %v590 = vunpack.c.l.s8.bf16 %v222
    %v591 = vunpack.c.l.s8.bf16 %v223
    %v592 = vunpack.c.l.s8.bf16 %v224
    %v593 = vunpack.c.l.s8.bf16 %v225
    %v594 = vunpack.c.l.s8.bf16 %v226
    %v595 = vunpack.c.l.s8.bf16 %v227
    %v596 = vunpack.c.l.s8.bf16 %v228
    %v597 = vunpack.c.l.s8.bf16 %v229
    %v598 = vunpack.c.h.s8.bf16 %v214
    %v599 = vunpack.c.h.s8.bf16 %v215
    %v600 = vunpack.c.h.s8.bf16 %v216
    %v601 = vunpack.c.h.s8.bf16 %v217
    %v602 = vunpack.c.h.s8.bf16 %v218
    %v603 = vunpack.c.h.s8.bf16 %v219
    %v604 = vunpack.c.h.s8.bf16 %v220
    %v605 = vunpack.c.h.s8.bf16 %v221
    %v606 = vunpack.c.h.s8.bf16 %v222
    %v607 = vunpack.c.h.s8.bf16 %v223
    %v608 = vunpack.c.h.s8.bf16 %v224
    %v609 = vunpack.c.h.s8.bf16 %v225
    %v610 = vunpack.c.h.s8.bf16 %v226
    %v611 = vunpack.c.h.s8.bf16 %v227
    %v612 = vunpack.c.h.s8.bf16 %v228
    %v613 = vunpack.c.h.s8.bf16 %v229
    %v614 = vunpack.c.l.s8.bf16 %v230
    %v615 = vunpack.c.l.s8.bf16 %v231
    %v616 = vunpack.c.l.s8.bf16 %v232
    %v617 = vunpack.c.l.s8.bf16 %v233
    %v618 = vunpack.c.l.s8.bf16 %v234
    %v619 = vunpack.c.l.s8.bf16 %v235
    %v620 = vunpack.c.l.s8.bf16 %v236
    %v621 = vunpack.c.l.s8.bf16 %v237
    %v622 = vunpack.c.l.s8.bf16 %v238
    %v623 = vunpack.c.l.s8.bf16 %v239
    %v624 = vunpack.c.l.s8.bf16 %v240
    %v625 = vunpack.c.l.s8.bf16 %v241
    %v626 = vunpack.c.l.s8.bf16 %v242
    %v627 = vunpack.c.l.s8.bf16 %v243
    %v628 = vunpack.c.l.s8.bf16 %v244
    %v629 = vunpack.c.l.s8.bf16 %v245
    %v630 = vunpack.c.h.s8.bf16 %v230
    %v631 = vunpack.c.h.s8.bf16 %v231
    %v632 = vunpack.c.h.s8.bf16 %v232
    %v633 = vunpack.c.h.s8.bf16 %v233
    %v634 = vunpack.c.h.s8.bf16 %v234
    %v635 = vunpack.c.h.s8.bf16 %v235
    %v636 = vunpack.c.h.s8.bf16 %v236
    %v637 = vunpack.c.h.s8.bf16 %v237
    %v638 = vunpack.c.h.s8.bf16 %v238
    %v639 = vunpack.c.h.s8.bf16 %v239
    %v640 = vunpack.c.h.s8.bf16 %v240
    %v641 = vunpack.c.h.s8.bf16 %v241
    %v642 = vunpack.c.h.s8.bf16 %v242
    %v643 = vunpack.c.h.s8.bf16 %v243
    %v644 = vunpack.c.h.s8.bf16 %v244
    %v645 = vunpack.c.h.s8.bf16 %v245
    %v646 = vunpack.c.l.s8.bf16 %v246
    %v647 = vunpack.c.l.s8.bf16 %v247
    %v648 = vunpack.c.l.s8.bf16 %v248
    %v649 = vunpack.c.l.s8.bf16 %v249
    %v650 = vunpack.c.l.s8.bf16 %v250
    %v651 = vunpack.c.l.s8.bf16 %v251
    %v652 = vunpack.c.l.s8.bf16 %v252
    %v653 = vunpack.c.l.s8.bf16 %v253
    %v654 = vunpack.c.l.s8.bf16 %v254
    %v655 = vunpack.c.l.s8.bf16 %v255
    %v656 = vunpack.c.l.s8.bf16 %v256
    %v657 = vunpack.c.l.s8.bf16 %v257
    %v658 = vunpack.c.l.s8.bf16 %v258
    %v659 = vunpack.c.l.s8.bf16 %v259
    %v660 = vunpack.c.l.s8.bf16 %v260
    %v661 = vunpack.c.l.s8.bf16 %v261
    %v662 = vunpack.c.h.s8.bf16 %v246
    %v663 = vunpack.c.h.s8.bf16 %v247
    %v664 = vunpack.c.h.s8.bf16 %v248
    %v665 = vunpack.c.h.s8.bf16 %v249
    %v666 = vunpack.c.h.s8.bf16 %v250
    %v667 = vunpack.c.h.s8.bf16 %v251
    %v668 = vunpack.c.h.s8.bf16 %v252
    %v669 = vunpack.c.h.s8.bf16 %v253
    %v670 = vunpack.c.h.s8.bf16 %v254
    %v671 = vunpack.c.h.s8.bf16 %v255
    %v672 = vunpack.c.h.s8.bf16 %v256
    %v673 = vunpack.c.h.s8.bf16 %v257
    %v674 = vunpack.c.h.s8.bf16 %v258
    %v675 = vunpack.c.h.s8.bf16 %v259
    %v676 = vunpack.c.h.s8.bf16 %v260
    %v677 = vunpack.c.h.s8.bf16 %v261
    %v678 = vunpack.c.l.s8.bf16 %v262
    %v679 = vunpack.c.l.s8.bf16 %v263
    %v680 = vunpack.c.l.s8.bf16 %v264
    %v681 = vunpack.c.l.s8.bf16 %v265
    %v682 = vunpack.c.l.s8.bf16 %v266
    %v683 = vunpack.c.l.s8.bf16 %v267
    %v684 = vunpack.c.l.s8.bf16 %v268
    %v685 = vunpack.c.l.s8.bf16 %v269
    %v686 = vunpack.c.l.s8.bf16 %v270
    %v687 = vunpack.c.l.s8.bf16 %v271
    %v688 = vunpack.c.l.s8.bf16 %v272
    %v689 = vunpack.c.l.s8.bf16 %v273
    %v690 = vunpack.c.l.s8.bf16 %v274
    %v691 = vunpack.c.l.s8.bf16 %v275
    %v692 = vunpack.c.l.s8.bf16 %v276
    %v693 = vunpack.c.l.s8.bf16 %v277
    %v694 = vunpack.c.h.s8.bf16 %v262
    %v695 = vunpack.c.h.s8.bf16 %v263
    %v696 = vunpack.c.h.s8.bf16 %v264
    %v697 = vunpack.c.h.s8.bf16 %v265
    %v698 = vunpack.c.h.s8.bf16 %v266
    %v699 = vunpack.c.h.s8.bf16 %v267
    %v700 = vunpack.c.h.s8.bf16 %v268
    %v701 = vunpack.c.h.s8.bf16 %v269
    %v702 = vunpack.c.h.s8.bf16 %v270
    %v703 = vunpack.c.h.s8.bf16 %v271
    %v704 = vunpack.c.h.s8.bf16 %v272
    %v705 = vunpack.c.h.s8.bf16 %v273
    %v706 = vunpack.c.h.s8.bf16 %v274
    %v707 = vunpack.c.h.s8.bf16 %v275
    %v708 = vunpack.c.h.s8.bf16 %v276
    %v709 = vunpack.c.h.s8.bf16 %v277
    %v710 = vunpack.c.l.s8.bf16 %v278
    %v711 = vunpack.c.l.s8.bf16 %v279
    %v712 = vunpack.c.l.s8.bf16 %v280
    %v713 = vunpack.c.l.s8.bf16 %v281
    %v714 = vunpack.c.l.s8.bf16 %v282
    %v715 = vunpack.c.l.s8.bf16 %v283
    %v716 = vunpack.c.l.s8.bf16 %v284
    %v717 = vunpack.c.l.s8.bf16 %v285
    %v718 = vunpack.c.l.s8.bf16 %v286
    %v719 = vunpack.c.l.s8.bf16 %v287
    %v720 = vunpack.c.l.s8.bf16 %v288
    %v721 = vunpack.c.l.s8.bf16 %v289
    %v722 = vunpack.c.l.s8.bf16 %v290
    %v723 = vunpack.c.l.s8.bf16 %v291
    %v724 = vunpack.c.l.s8.bf16 %v292
    %v725 = vunpack.c.l.s8.bf16 %v293
    %v726 = vunpack.c.h.s8.bf16 %v278
    %v727 = vunpack.c.h.s8.bf16 %v279
    %v728 = vunpack.c.h.s8.bf16 %v280
    %v729 = vunpack.c.h.s8.bf16 %v281
    %v730 = vunpack.c.h.s8.bf16 %v282
    %v731 = vunpack.c.h.s8.bf16 %v283
    %v732 = vunpack.c.h.s8.bf16 %v284
    %v733 = vunpack.c.h.s8.bf16 %v285
    %v734 = vunpack.c.h.s8.bf16 %v286
    %v735 = vunpack.c.h.s8.bf16 %v287
    %v736 = vunpack.c.h.s8.bf16 %v288
    %v737 = vunpack.c.h.s8.bf16 %v289
    %v738 = vunpack.c.h.s8.bf16 %v290
    %v739 = vunpack.c.h.s8.bf16 %v291
    %v740 = vunpack.c.h.s8.bf16 %v292
    %v741 = vunpack.c.h.s8.bf16 %v293
    %v742 = vunpack.c.l.s8.bf16 %v294
    %v743 = vunpack.c.l.s8.bf16 %v295
    %v744 = vunpack.c.l.s8.bf16 %v296
    %v745 = vunpack.c.l.s8.bf16 %v297
    %v746 = vunpack.c.l.s8.bf16 %v298
    %v747 = vunpack.c.l.s8.bf16 %v299
    %v748 = vunpack.c.l.s8.bf16 %v300
    %v749 = vunpack.c.l.s8.bf16 %v301
    %v750 = vunpack.c.l.s8.bf16 %v302
    %v751 = vunpack.c.l.s8.bf16 %v303
    %v752 = vunpack.c.l.s8.bf16 %v304
    %v753 = vunpack.c.l.s8.bf16 %v305
    %v754 = vunpack.c.l.s8.bf16 %v306
    %v755 = vunpack.c.l.s8.bf16 %v307
    %v756 = vunpack.c.l.s8.bf16 %v308
    %v757 = vunpack.c.l.s8.bf16 %v309
    %v758 = vunpack.c.h.s8.bf16 %v294
    %v759 = vunpack.c.h.s8.bf16 %v295
    %v760 = vunpack.c.h.s8.bf16 %v296
    %v761 = vunpack.c.h.s8.bf16 %v297
    %v762 = vunpack.c.h.s8.bf16 %v298
    %v763 = vunpack.c.h.s8.bf16 %v299
    %v764 = vunpack.c.h.s8.bf16 %v300
    %v765 = vunpack.c.h.s8.bf16 %v301
    %v766 = vunpack.c.h.s8.bf16 %v302
    %v767 = vunpack.c.h.s8.bf16 %v303
    %v768 = vunpack.c.h.s8.bf16 %v304
    %v769 = vunpack.c.h.s8.bf16 %v305
    %v770 = vunpack.c.h.s8.bf16 %v306
    %v771 = vunpack.c.h.s8.bf16 %v307
    %v772 = vunpack.c.h.s8.bf16 %v308
    %v773 = vunpack.c.h.s8.bf16 %v309
    %v774 = vunpack.c.l.s8.bf16 %v310
    %v775 = vunpack.c.l.s8.bf16 %v311
    %v776 = vunpack.c.l.s8.bf16 %v312
    %v777 = vunpack.c.l.s8.bf16 %v313
    %v778 = vunpack.c.l.s8.bf16 %v314
    %v779 = vunpack.c.l.s8.bf16 %v315
    %v780 = vunpack.c.l.s8.bf16 %v316
    %v781 = vunpack.c.l.s8.bf16 %v317
    %v782 = vunpack.c.l.s8.bf16 %v318
    %v783 = vunpack.c.l.s8.bf16 %v319
    %v784 = vunpack.c.l.s8.bf16 %v320
    %v785 = vunpack.c.l.s8.bf16 %v321
    %v786 = vunpack.c.l.s8.bf16 %v322
    %v787 = vunpack.c.l.s8.bf16 %v323
    %v788 = vunpack.c.l.s8.bf16 %v324
    %v789 = vunpack.c.l.s8.bf16 %v325
    %v790 = vunpack.c.h.s8.bf16 %v310
    %v791 = vunpack.c.h.s8.bf16 %v311
    %v792 = vunpack.c.h.s8.bf16 %v312
    %v793 = vunpack.c.h.s8.bf16 %v313
    %v794 = vunpack.c.h.s8.bf16 %v314
    %v795 = vunpack.c.h.s8.bf16 %v315
    %v796 = vunpack.c.h.s8.bf16 %v316
    %v797 = vunpack.c.h.s8.bf16 %v317
    %v798 = vunpack.c.h.s8.bf16 %v318
    %v799 = vunpack.c.h.s8.bf16 %v319
    %v800 = vunpack.c.h.s8.bf16 %v320
    %v801 = vunpack.c.h.s8.bf16 %v321
    %v802 = vunpack.c.h.s8.bf16 %v322
    %v803 = vunpack.c.h.s8.bf16 %v323
    %v804 = vunpack.c.h.s8.bf16 %v324
    %v805 = vunpack.c.h.s8.bf16 %v325
    %v806 = vunpack.c.l.s8.bf16 %v326
    %v807 = vunpack.c.l.s8.bf16 %v327
    %v808 = vunpack.c.l.s8.bf16 %v328
    %v809 = vunpack.c.l.s8.bf16 %v329
    %v810 = vunpack.c.l.s8.bf16 %v330
    %v811 = vunpack.c.l.s8.bf16 %v331
    %v812 = vunpack.c.l.s8.bf16 %v332
    %v813 = vunpack.c.l.s8.bf16 %v333
    %v814 = vunpack.c.l.s8.bf16 %v334
    %v815 = vunpack.c.l.s8.bf16 %v335
    %v816 = vunpack.c.l.s8.bf16 %v336
    %v817 = vunpack.c.l.s8.bf16 %v337
    %v818 = vunpack.c.l.s8.bf16 %v338
    %v819 = vunpack.c.l.s8.bf16 %v339
    %v820 = vunpack.c.l.s8.bf16 %v340
    %v821 = vunpack.c.l.s8.bf16 %v341
    %v822 = vunpack.c.h.s8.bf16 %v326
    %v823 = vunpack.c.h.s8.bf16 %v327
    %v824 = vunpack.c.h.s8.bf16 %v328
    %v825 = vunpack.c.h.s8.bf16 %v329
    %v826 = vunpack.c.h.s8.bf16 %v330
    %v827 = vunpack.c.h.s8.bf16 %v331
    %v828 = vunpack.c.h.s8.bf16 %v332
    %v829 = vunpack.c.h.s8.bf16 %v333
    %v830 = vunpack.c.h.s8.bf16 %v334
    %v831 = vunpack.c.h.s8.bf16 %v335
    %v832 = vunpack.c.h.s8.bf16 %v336
    %v833 = vunpack.c.h.s8.bf16 %v337
    %v834 = vunpack.c.h.s8.bf16 %v338
    %v835 = vunpack.c.h.s8.bf16 %v339
    %v836 = vunpack.c.h.s8.bf16 %v340
    %v837 = vunpack.c.h.s8.bf16 %v341
    %v838 = vunpack.c.l.s8.bf16 %v342
    %v839 = vunpack.c.l.s8.bf16 %v343
    %v840 = vunpack.c.l.s8.bf16 %v344
    %v841 = vunpack.c.l.s8.bf16 %v345
    %v842 = vunpack.c.l.s8.bf16 %v346
    %v843 = vunpack.c.l.s8.bf16 %v347
    %v844 = vunpack.c.l.s8.bf16 %v348
    %v845 = vunpack.c.l.s8.bf16 %v349
    %v846 = vunpack.c.l.s8.bf16 %v350
    %v847 = vunpack.c.l.s8.bf16 %v351
    %v848 = vunpack.c.l.s8.bf16 %v352
    %v849 = vunpack.c.l.s8.bf16 %v353
    %v850 = vunpack.c.l.s8.bf16 %v354
    %v851 = vunpack.c.l.s8.bf16 %v355
    %v852 = vunpack.c.l.s8.bf16 %v356
    %v853 = vunpack.c.l.s8.bf16 %v357
    %v854 = vunpack.c.h.s8.bf16 %v342
    %v855 = vunpack.c.h.s8.bf16 %v343
    %v856 = vunpack.c.h.s8.bf16 %v344
    %v857 = vunpack.c.h.s8.bf16 %v345
    %v858 = vunpack.c.h.s8.bf16 %v346
    %v859 = vunpack.c.h.s8.bf16 %v347
    %v860 = vunpack.c.h.s8.bf16 %v348
    %v861 = vunpack.c.h.s8.bf16 %v349
    %v862 = vunpack.c.h.s8.bf16 %v350
    %v863 = vunpack.c.h.s8.bf16 %v351
    %v864 = vunpack.c.h.s8.bf16 %v352
    %v865 = vunpack.c.h.s8.bf16 %v353
    %v866 = vunpack.c.h.s8.bf16 %v354
    %v867 = vunpack.c.h.s8.bf16 %v355
    %v868 = vunpack.c.h.s8.bf16 %v356
    %v869 = vunpack.c.h.s8.bf16 %v357
    %v870 = vld [vmem:[#allocation2] sm:$0xf]
    %v873 = vunpack.c.l.s4 1966171168
    %v874 = vunpack.c.0.s8 %v873
    %v875 = vlaneseq
    %v876 = vshrl.u32 %v875, 7
    %v877 = vsub.s32 %v874, %v876
    %v878 = vrot.slane %v870, %v877
    %v879 = vcombine.high %v878, %v878
    %v881 = vunpack.c.l.s4 1966171168
    %v882 = vunpack.c.0.s8 %v881
    %v883 = vlaneseq
    %v884 = vshrl.u32 %v883, 7
    %v885 = vsub.s32 %v882, %v884
    %v886 = vrot.slane %v878, %v885
    %v888 = vunpack.c.l.s4 1966171168
    %v889 = vunpack.c.0.s8 %v888
    %v890 = vlaneseq
    %v891 = vshrl.u32 %v890, 7
    %v892 = vsub.s32 %v889, %v891
    %v893 = vrot.slane %v879, %v892
    %v894 = vcombine.high %v886, %v886
    %v895 = vcombine.high %v893, %v893
    %900 = vmatprep.subr.bf16.mxu0 %v359
    %901 = vmatpush1.bf16.msra.mxu0 %v358
    %902 = vmatprep.subr.bf16.mxu0 %v375
    %903 = vmatpush1.bf16.msra.mxu0 %v374
    %904 = vmatprep.subr.bf16.mxu0 %v391
    %905 = vmatpush1.bf16.msra.mxu0 %v390
    %906 = vmatprep.subr.bf16.mxu0 %v407
    %907 = vmatpush1.bf16.msra.mxu0 %v406
    %908 = vmatprep.subr.bf16.mxu0 %v423
    %909 = vmatpush1.bf16.msra.mxu0 %v422
    %910 = vmatprep.subr.bf16.mxu0 %v439
    %911 = vmatpush1.bf16.msra.mxu0 %v438
    %912 = vmatprep.subr.bf16.mxu0 %v455
    %913 = vmatpush1.bf16.msra.mxu0 %v454
    %914 = vmatprep.subr.bf16.mxu0 %v471
    %915 = vmatpush1.bf16.msra.mxu0 %v470
    %916 = vmatprep.subr.bf16.mxu0 %v487
    %917 = vmatpush1.bf16.msra.mxu0 %v486
    %918 = vmatprep.subr.bf16.mxu0 %v503
    %919 = vmatpush1.bf16.msra.mxu0 %v502
    %920 = vmatprep.subr.bf16.mxu0 %v519
    %921 = vmatpush1.bf16.msra.mxu0 %v518
    %922 = vmatprep.subr.bf16.mxu0 %v535
    %923 = vmatpush1.bf16.msra.mxu0 %v534
    %924 = vmatprep.subr.bf16.mxu0 %v551
    %925 = vmatpush1.bf16.msra.mxu0 %v550
    %926 = vmatprep.subr.bf16.mxu0 %v567
    %927 = vmatpush1.bf16.msra.mxu0 %v566
    %928 = vmatprep.subr.bf16.mxu0 %v583
    %929 = vmatpush1.bf16.msra.mxu0 %v582
    %930 = vmatprep.subr.bf16.mxu0 %v599
    %931 = vmatpush1.bf16.msra.mxu0 %v598
    %932 = vmatprep.mubr.bf16.mxu0 %v893
    %933 = vmatmul.mubr.bf16.gmra.mrb[0].mxu0 %v886
    %v934 = vpop.f32.mrb[0].mxu0
    %v935 = vadd.f32 0.0, %v934
    %v936 = vpop.f32.mrb[0].mxu0
    %v937 = vadd.f32 0.0, %v936
    %v938 = vpop.f32.mrb[0].mxu0
    %v939 = vpop.f32.mrb[0].mxu0
    %940 = vdwg.mxu0
    %941 = vmatprep.subr.bf16.mxu0 %v615
    %942 = vmatpush1.bf16.msra.mxu0 %v614
    %943 = vmatprep.subr.bf16.mxu0 %v631
    %944 = vmatpush1.bf16.msra.mxu0 %v630
    %945 = vmatprep.subr.bf16.mxu0 %v647
    %946 = vmatpush1.bf16.msra.mxu0 %v646
    %947 = vmatprep.subr.bf16.mxu0 %v663
    %948 = vmatpush1.bf16.msra.mxu0 %v662
    %949 = vmatprep.subr.bf16.mxu0 %v679
    %950 = vmatpush1.bf16.msra.mxu0 %v678
    %951 = vmatprep.subr.bf16.mxu0 %v695
    %952 = vmatpush1.bf16.msra.mxu0 %v694
    %953 = vmatprep.subr.bf16.mxu0 %v711
    %954 = vmatpush1.bf16.msra.mxu0 %v710
    %955 = vmatprep.subr.bf16.mxu0 %v727
    %956 = vmatpush1.bf16.msra.mxu0 %v726
    %957 = vmatprep.subr.bf16.mxu0 %v743
    %958 = vmatpush1.bf16.msra.mxu0 %v742
    %959 = vmatprep.subr.bf16.mxu0 %v759
    %960 = vmatpush1.bf16.msra.mxu0 %v758
    %961 = vmatprep.subr.bf16.mxu0 %v775
    %962 = vmatpush1.bf16.msra.mxu0 %v774
    %963 = vmatprep.subr.bf16.mxu0 %v791
    %964 = vmatpush1.bf16.msra.mxu0 %v790
    %965 = vmatprep.subr.bf16.mxu0 %v807
    %966 = vmatpush1.bf16.msra.mxu0 %v806
    %967 = vmatprep.subr.bf16.mxu0 %v823
    %968 = vmatpush1.bf16.msra.mxu0 %v822
    %969 = vmatprep.subr.bf16.mxu0 %v839
    %970 = vmatpush1.bf16.msra.mxu0 %v838
    %971 = vmatprep.subr.bf16.mxu0 %v855
    %972 = vmatpush1.bf16.msra.mxu0 %v854
    %973 = vmatprep.mubr.bf16.mxu0 %v895
    %974 = vmatmul.mubr.bf16.gmra.mrb[0].mxu0 %v894
    %v975 = vpop.f32.mrb[0].mxu0
    %v976 = vadd.f32 %v935, %v975
    %v977 = vpop.f32.mrb[0].mxu0
    %v978 = vadd.f32 %v937, %v977
    %v979 = vpop.f32.mrb[0].mxu0
    %v980 = vpop.f32.mrb[0].mxu0
    %981 = vdwg.mxu0
    %982 = vmatprep.subr.bf16.mxu0 %v361
    %983 = vmatpush1.bf16.msra.mxu0 %v360
    %984 = vmatprep.subr.bf16.mxu0 %v377
    %985 = vmatpush1.bf16.msra.mxu0 %v376
    %986 = vmatprep.subr.bf16.mxu0 %v393
    %987 = vmatpush1.bf16.msra.mxu0 %v392
    %988 = vmatprep.subr.bf16.mxu0 %v409
    %989 = vmatpush1.bf16.msra.mxu0 %v408
    %990 = vmatprep.subr.bf16.mxu0 %v425
    %991 = vmatpush1.bf16.msra.mxu0 %v424
    %992 = vmatprep.subr.bf16.mxu0 %v441
    %993 = vmatpush1.bf16.msra.mxu0 %v440
    %994 = vmatprep.subr.bf16.mxu0 %v457
    %995 = vmatpush1.bf16.msra.mxu0 %v456
    %996 = vmatprep.subr.bf16.mxu0 %v473
    %997 = vmatpush1.bf16.msra.mxu0 %v472
    %998 = vmatprep.subr.bf16.mxu0 %v489
    %999 = vmatpush1.bf16.msra.mxu0 %v488
    %1000 = vmatprep.subr.bf16.mxu0 %v505
    %1001 = vmatpush1.bf16.msra.mxu0 %v504
    %1002 = vmatprep.subr.bf16.mxu0 %v521
    %1003 = vmatpush1.bf16.msra.mxu0 %v520
    %1004 = vmatprep.subr.bf16.mxu0 %v537
    %1005 = vmatpush1.bf16.msra.mxu0 %v536
    %1006 = vmatprep.subr.bf16.mxu0 %v553
    %1007 = vmatpush1.bf16.msra.mxu0 %v552
    %1008 = vmatprep.subr.bf16.mxu0 %v569
    %1009 = vmatpush1.bf16.msra.mxu0 %v568
    %1010 = vmatprep.subr.bf16.mxu0 %v585
    %1011 = vmatpush1.bf16.msra.mxu0 %v584
    %1012 = vmatprep.subr.bf16.mxu0 %v601
    %1013 = vmatpush1.bf16.msra.mxu0 %v600
    %1014 = vmatprep.mubr.bf16.mxu0 %v893
    %1015 = vmatmul.mubr.bf16.gmra.mrb[0].mxu0 %v886
    %v1016 = vpop.f32.mrb[0].mxu0
    %v1017 = vadd.f32 0.0, %v1016
    %v1018 = vpop.f32.mrb[0].mxu0
    %v1019 = vadd.f32 0.0, %v1018
    %v1020 = vpop.f32.mrb[0].mxu0
    %v1021 = vpop.f32.mrb[0].mxu0
    %1022 = vdwg.mxu0
    %1023 = vmatprep.subr.bf16.mxu0 %v617
    %1024 = vmatpush1.bf16.msra.mxu0 %v616
    %1025 = vmatprep.subr.bf16.mxu0 %v633
    %1026 = vmatpush1.bf16.msra.mxu0 %v632
    %1027 = vmatprep.subr.bf16.mxu0 %v649
    %1028 = vmatpush1.bf16.msra.mxu0 %v648
    %1029 = vmatprep.subr.bf16.mxu0 %v665
    %1030 = vmatpush1.bf16.msra.mxu0 %v664
    %1031 = vmatprep.subr.bf16.mxu0 %v681
    %1032 = vmatpush1.bf16.msra.mxu0 %v680
    %1033 = vmatprep.subr.bf16.mxu0 %v697
    %1034 = vmatpush1.bf16.msra.mxu0 %v696
    %1035 = vmatprep.subr.bf16.mxu0 %v713
    %1036 = vmatpush1.bf16.msra.mxu0 %v712
    %1037 = vmatprep.subr.bf16.mxu0 %v729
    %1038 = vmatpush1.bf16.msra.mxu0 %v728
    %1039 = vmatprep.subr.bf16.mxu0 %v745
    %1040 = vmatpush1.bf16.msra.mxu0 %v744
    %1041 = vmatprep.subr.bf16.mxu0 %v761
    %1042 = vmatpush1.bf16.msra.mxu0 %v760
    %1043 = vmatprep.subr.bf16.mxu0 %v777
    %1044 = vmatpush1.bf16.msra.mxu0 %v776
    %1045 = vmatprep.subr.bf16.mxu0 %v793
    %1046 = vmatpush1.bf16.msra.mxu0 %v792
    %1047 = vmatprep.subr.bf16.mxu0 %v809
    %1048 = vmatpush1.bf16.msra.mxu0 %v808
    %1049 = vmatprep.subr.bf16.mxu0 %v825
    %1050 = vmatpush1.bf16.msra.mxu0 %v824
    %1051 = vmatprep.subr.bf16.mxu0 %v841
    %1052 = vmatpush1.bf16.msra.mxu0 %v840
    %1053 = vmatprep.subr.bf16.mxu0 %v857
    %1054 = vmatpush1.bf16.msra.mxu0 %v856
    %1055 = vmatprep.mubr.bf16.mxu0 %v895
    %1056 = vmatmul.mubr.bf16.gmra.mrb[0].mxu0 %v894
    %v1057 = vpop.f32.mrb[0].mxu0
    %v1058 = vadd.f32 %v1017, %v1057
    %v1059 = vpop.f32.mrb[0].mxu0
    %v1060 = vadd.f32 %v1019, %v1059
    %v1061 = vpop.f32.mrb[0].mxu0
    %v1062 = vpop.f32.mrb[0].mxu0
    %1063 = vdwg.mxu0
    %1064 = vmatprep.subr.bf16.mxu0 %v363
    %1065 = vmatpush1.bf16.msra.mxu0 %v362
    %1066 = vmatprep.subr.bf16.mxu0 %v379
    %1067 = vmatpush1.bf16.msra.mxu0 %v378
    %1068 = vmatprep.subr.bf16.mxu0 %v395
    %1069 = vmatpush1.bf16.msra.mxu0 %v394
    %1070 = vmatprep.subr.bf16.mxu0 %v411
    %1071 = vmatpush1.bf16.msra.mxu0 %v410
    %1072 = vmatprep.subr.bf16.mxu0 %v427
    %1073 = vmatpush1.bf16.msra.mxu0 %v426
    %1074 = vmatprep.subr.bf16.mxu0 %v443
    %1075 = vmatpush1.bf16.msra.mxu0 %v442
    %1076 = vmatprep.subr.bf16.mxu0 %v459
    %1077 = vmatpush1.bf16.msra.mxu0 %v458
    %1078 = vmatprep.subr.bf16.mxu0 %v475
    %1079 = vmatpush1.bf16.msra.mxu0 %v474
    %1080 = vmatprep.subr.bf16.mxu0 %v491
    %1081 = vmatpush1.bf16.msra.mxu0 %v490
    %1082 = vmatprep.subr.bf16.mxu0 %v507
    %1083 = vmatpush1.bf16.msra.mxu0 %v506
    %1084 = vmatprep.subr.bf16.mxu0 %v523
    %1085 = vmatpush1.bf16.msra.mxu0 %v522
    %1086 = vmatprep.subr.bf16.mxu0 %v539
    %1087 = vmatpush1.bf16.msra.mxu0 %v538
    %1088 = vmatprep.subr.bf16.mxu0 %v555
    %1089 = vmatpush1.bf16.msra.mxu0 %v554
    %1090 = vmatprep.subr.bf16.mxu0 %v571
    %1091 = vmatpush1.bf16.msra.mxu0 %v570
    %1092 = vmatprep.subr.bf16.mxu0 %v587
    %1093 = vmatpush1.bf16.msra.mxu0 %v586
    %1094 = vmatprep.subr.bf16.mxu0 %v603
    %1095 = vmatpush1.bf16.msra.mxu0 %v602
    %1096 = vmatprep.mubr.bf16.mxu0 %v893
    %1097 = vmatmul.mubr.bf16.gmra.mrb[0].mxu0 %v886
    %v1098 = vpop.f32.mrb[0].mxu0
    %v1099 = vadd.f32 0.0, %v1098
    %v1100 = vpop.f32.mrb[0].mxu0
    %v1101 = vadd.f32 0.0, %v1100
    %v1102 = vpop.f32.mrb[0].mxu0
    %v1103 = vpop.f32.mrb[0].mxu0
    %1104 = vdwg.mxu0
    %1105 = vmatprep.subr.bf16.mxu0 %v619
    %1106 = vmatpush1.bf16.msra.mxu0 %v618
    %1107 = vmatprep.subr.bf16.mxu0 %v635
    %1108 = vmatpush1.bf16.msra.mxu0 %v634
    %1109 = vmatprep.subr.bf16.mxu0 %v651
    %1110 = vmatpush1.bf16.msra.mxu0 %v650
    %1111 = vmatprep.subr.bf16.mxu0 %v667
    %1112 = vmatpush1.bf16.msra.mxu0 %v666
    %1113 = vmatprep.subr.bf16.mxu0 %v683
    %1114 = vmatpush1.bf16.msra.mxu0 %v682
    %1115 = vmatprep.subr.bf16.mxu0 %v699
    %1116 = vmatpush1.bf16.msra.mxu0 %v698
    %1117 = vmatprep.subr.bf16.mxu0 %v715
    %1118 = vmatpush1.bf16.msra.mxu0 %v714
    %1119 = vmatprep.subr.bf16.mxu0 %v731
    %1120 = vmatpush1.bf16.msra.mxu0 %v730
    %1121 = vmatprep.subr.bf16.mxu0 %v747
    %1122 = vmatpush1.bf16.msra.mxu0 %v746
    %1123 = vmatprep.subr.bf16.mxu0 %v763
    %1124 = vmatpush1.bf16.msra.mxu0 %v762
    %1125 = vmatprep.subr.bf16.mxu0 %v779
    %1126 = vmatpush1.bf16.msra.mxu0 %v778
    %1127 = vmatprep.subr.bf16.mxu0 %v795
    %1128 = vmatpush1.bf16.msra.mxu0 %v794
    %1129 = vmatprep.subr.bf16.mxu0 %v811
    %1130 = vmatpush1.bf16.msra.mxu0 %v810
    %1131 = vmatprep.subr.bf16.mxu0 %v827
    %1132 = vmatpush1.bf16.msra.mxu0 %v826
    %1133 = vmatprep.subr.bf16.mxu0 %v843
    %1134 = vmatpush1.bf16.msra.mxu0 %v842
    %1135 = vmatprep.subr.bf16.mxu0 %v859
    %1136 = vmatpush1.bf16.msra.mxu0 %v858
    %1137 = vmatprep.mubr.bf16.mxu0 %v895
    %1138 = vmatmul.mubr.bf16.gmra.mrb[0].mxu0 %v894
    %v1139 = vpop.f32.mrb[0].mxu0
    %v1140 = vadd.f32 %v1099, %v1139
    %v1141 = vpop.f32.mrb[0].mxu0
    %v1142 = vadd.f32 %v1101, %v1141
    %v1143 = vpop.f32.mrb[0].mxu0
    %v1144 = vpop.f32.mrb[0].mxu0
    %1145 = vdwg.mxu0
    %1146 = vmatprep.subr.bf16.mxu0 %v365
    %1147 = vmatpush1.bf16.msra.mxu0 %v364
    %1148 = vmatprep.subr.bf16.mxu0 %v381
    %1149 = vmatpush1.bf16.msra.mxu0 %v380
    %1150 = vmatprep.subr.bf16.mxu0 %v397
    %1151 = vmatpush1.bf16.msra.mxu0 %v396
    %1152 = vmatprep.subr.bf16.mxu0 %v413
    %1153 = vmatpush1.bf16.msra.mxu0 %v412
    %1154 = vmatprep.subr.bf16.mxu0 %v429
    %1155 = vmatpush1.bf16.msra.mxu0 %v428
    %1156 = vmatprep.subr.bf16.mxu0 %v445
    %1157 = vmatpush1.bf16.msra.mxu0 %v444
    %1158 = vmatprep.subr.bf16.mxu0 %v461
    %1159 = vmatpush1.bf16.msra.mxu0 %v460
    %1160 = vmatprep.subr.bf16.mxu0 %v477
    %1161 = vmatpush1.bf16.msra.mxu0 %v476
    %1162 = vmatprep.subr.bf16.mxu0 %v493
    %1163 = vmatpush1.bf16.msra.mxu0 %v492
    %1164 = vmatprep.subr.bf16.mxu0 %v509
    %1165 = vmatpush1.bf16.msra.mxu0 %v508
    %1166 = vmatprep.subr.bf16.mxu0 %v525
    %1167 = vmatpush1.bf16.msra.mxu0 %v524
    %1168 = vmatprep.subr.bf16.mxu0 %v541
    %1169 = vmatpush1.bf16.msra.mxu0 %v540
    %1170 = vmatprep.subr.bf16.mxu0 %v557
    %1171 = vmatpush1.bf16.msra.mxu0 %v556
    %1172 = vmatprep.subr.bf16.mxu0 %v573
    %1173 = vmatpush1.bf16.msra.mxu0 %v572
    %1174 = vmatprep.subr.bf16.mxu0 %v589
    %1175 = vmatpush1.bf16.msra.mxu0 %v588
    %1176 = vmatprep.subr.bf16.mxu0 %v605
    %1177 = vmatpush1.bf16.msra.mxu0 %v604
    %1178 = vmatprep.mubr.bf16.mxu0 %v893
    %1179 = vmatmul.mubr.bf16.gmra.mrb[0].mxu0 %v886
    %v1180 = vpop.f32.mrb[0].mxu0
    %v1181 = vadd.f32 0.0, %v1180
    %v1182 = vpop.f32.mrb[0].mxu0
    %v1183 = vadd.f32 0.0, %v1182
    %v1184 = vpop.f32.mrb[0].mxu0
    %v1185 = vpop.f32.mrb[0].mxu0
    %1186 = vdwg.mxu0
    %1187 = vmatprep.subr.bf16.mxu0 %v621
    %1188 = vmatpush1.bf16.msra.mxu0 %v620
    %1189 = vmatprep.subr.bf16.mxu0 %v637
    %1190 = vmatpush1.bf16.msra.mxu0 %v636
    %1191 = vmatprep.subr.bf16.mxu0 %v653
    %1192 = vmatpush1.bf16.msra.mxu0 %v652
    %1193 = vmatprep.subr.bf16.mxu0 %v669
    %1194 = vmatpush1.bf16.msra.mxu0 %v668
    %1195 = vmatprep.subr.bf16.mxu0 %v685
    %1196 = vmatpush1.bf16.msra.mxu0 %v684
    %1197 = vmatprep.subr.bf16.mxu0 %v701
    %1198 = vmatpush1.bf16.msra.mxu0 %v700
    %1199 = vmatprep.subr.bf16.mxu0 %v717
    %1200 = vmatpush1.bf16.msra.mxu0 %v716
    %1201 = vmatprep.subr.bf16.mxu0 %v733
    %1202 = vmatpush1.bf16.msra.mxu0 %v732
    %1203 = vmatprep.subr.bf16.mxu0 %v749
    %1204 = vmatpush1.bf16.msra.mxu0 %v748
    %1205 = vmatprep.subr.bf16.mxu0 %v765
    %1206 = vmatpush1.bf16.msra.mxu0 %v764
    %1207 = vmatprep.subr.bf16.mxu0 %v781
    %1208 = vmatpush1.bf16.msra.mxu0 %v780
    %1209 = vmatprep.subr.bf16.mxu0 %v797
    %1210 = vmatpush1.bf16.msra.mxu0 %v796
    %1211 = vmatprep.subr.bf16.mxu0 %v813
    %1212 = vmatpush1.bf16.msra.mxu0 %v812
    %1213 = vmatprep.subr.bf16.mxu0 %v829
    %1214 = vmatpush1.bf16.msra.mxu0 %v828
    %1215 = vmatprep.subr.bf16.mxu0 %v845
    %1216 = vmatpush1.bf16.msra.mxu0 %v844
    %1217 = vmatprep.subr.bf16.mxu0 %v861
    %1218 = vmatpush1.bf16.msra.mxu0 %v860
    %1219 = vmatprep.mubr.bf16.mxu0 %v895
    %1220 = vmatmul.mubr.bf16.gmra.mrb[0].mxu0 %v894
    %v1221 = vpop.f32.mrb[0].mxu0
    %v1222 = vadd.f32 %v1181, %v1221
    %v1223 = vpop.f32.mrb[0].mxu0
    %v1224 = vadd.f32 %v1183, %v1223
    %v1225 = vpop.f32.mrb[0].mxu0
    %v1226 = vpop.f32.mrb[0].mxu0
    %1227 = vdwg.mxu0
    %1228 = vmatprep.subr.bf16.mxu0 %v367
    %1229 = vmatpush1.bf16.msra.mxu0 %v366
    %1230 = vmatprep.subr.bf16.mxu0 %v383
    %1231 = vmatpush1.bf16.msra.mxu0 %v382
    %1232 = vmatprep.subr.bf16.mxu0 %v399
    %1233 = vmatpush1.bf16.msra.mxu0 %v398
    %1234 = vmatprep.subr.bf16.mxu0 %v415
    %1235 = vmatpush1.bf16.msra.mxu0 %v414
    %1236 = vmatprep.subr.bf16.mxu0 %v431
    %1237 = vmatpush1.bf16.msra.mxu0 %v430
    %1238 = vmatprep.subr.bf16.mxu0 %v447
    %1239 = vmatpush1.bf16.msra.mxu0 %v446
    %1240 = vmatprep.subr.bf16.mxu0 %v463
    %1241 = vmatpush1.bf16.msra.mxu0 %v462
    %1242 = vmatprep.subr.bf16.mxu0 %v479
    %1243 = vmatpush1.bf16.msra.mxu0 %v478
    %1244 = vmatprep.subr.bf16.mxu0 %v495
    %1245 = vmatpush1.bf16.msra.mxu0 %v494
    %1246 = vmatprep.subr.bf16.mxu0 %v511
    %1247 = vmatpush1.bf16.msra.mxu0 %v510
    %1248 = vmatprep.subr.bf16.mxu0 %v527
    %1249 = vmatpush1.bf16.msra.mxu0 %v526
    %1250 = vmatprep.subr.bf16.mxu0 %v543
    %1251 = vmatpush1.bf16.msra.mxu0 %v542
    %1252 = vmatprep.subr.bf16.mxu0 %v559
    %1253 = vmatpush1.bf16.msra.mxu0 %v558
    %1254 = vmatprep.subr.bf16.mxu0 %v575
    %1255 = vmatpush1.bf16.msra.mxu0 %v574
    %1256 = vmatprep.subr.bf16.mxu0 %v591
    %1257 = vmatpush1.bf16.msra.mxu0 %v590
    %1258 = vmatprep.subr.bf16.mxu0 %v607
    %1259 = vmatpush1.bf16.msra.mxu0 %v606
    %1260 = vmatprep.mubr.bf16.mxu0 %v893
    %1261 = vmatmul.mubr.bf16.gmra.mrb[0].mxu0 %v886
    %v1262 = vpop.f32.mrb[0].mxu0
    %v1263 = vadd.f32 0.0, %v1262
    %v1264 = vpop.f32.mrb[0].mxu0
    %v1265 = vadd.f32 0.0, %v1264
    %v1266 = vpop.f32.mrb[0].mxu0
    %v1267 = vpop.f32.mrb[0].mxu0
    %1268 = vdwg.mxu0
    %1269 = vmatprep.subr.bf16.mxu0 %v623
    %1270 = vmatpush1.bf16.msra.mxu0 %v622
    %1271 = vmatprep.subr.bf16.mxu0 %v639
    %1272 = vmatpush1.bf16.msra.mxu0 %v638
    %1273 = vmatprep.subr.bf16.mxu0 %v655
    %1274 = vmatpush1.bf16.msra.mxu0 %v654
    %1275 = vmatprep.subr.bf16.mxu0 %v671
    %1276 = vmatpush1.bf16.msra.mxu0 %v670
    %1277 = vmatprep.subr.bf16.mxu0 %v687
    %1278 = vmatpush1.bf16.msra.mxu0 %v686
    %1279 = vmatprep.subr.bf16.mxu0 %v703
    %1280 = vmatpush1.bf16.msra.mxu0 %v702
    %1281 = vmatprep.subr.bf16.mxu0 %v719
    %1282 = vmatpush1.bf16.msra.mxu0 %v718
    %1283 = vmatprep.subr.bf16.mxu0 %v735
    %1284 = vmatpush1.bf16.msra.mxu0 %v734
    %1285 = vmatprep.subr.bf16.mxu0 %v751
    %1286 = vmatpush1.bf16.msra.mxu0 %v750
    %1287 = vmatprep.subr.bf16.mxu0 %v767
    %1288 = vmatpush1.bf16.msra.mxu0 %v766
    %1289 = vmatprep.subr.bf16.mxu0 %v783
    %1290 = vmatpush1.bf16.msra.mxu0 %v782
    %1291 = vmatprep.subr.bf16.mxu0 %v799
    %1292 = vmatpush1.bf16.msra.mxu0 %v798
    %1293 = vmatprep.subr.bf16.mxu0 %v815
    %1294 = vmatpush1.bf16.msra.mxu0 %v814
    %1295 = vmatprep.subr.bf16.mxu0 %v831
    %1296 = vmatpush1.bf16.msra.mxu0 %v830
    %1297 = vmatprep.subr.bf16.mxu0 %v847
    %1298 = vmatpush1.bf16.msra.mxu0 %v846
    %1299 = vmatprep.subr.bf16.mxu0 %v863
    %1300 = vmatpush1.bf16.msra.mxu0 %v862
    %1301 = vmatprep.mubr.bf16.mxu0 %v895
    %1302 = vmatmul.mubr.bf16.gmra.mrb[0].mxu0 %v894
    %v1303 = vpop.f32.mrb[0].mxu0
    %v1304 = vadd.f32 %v1263, %v1303
    %v1305 = vpop.f32.mrb[0].mxu0
    %v1306 = vadd.f32 %v1265, %v1305
    %v1307 = vpop.f32.mrb[0].mxu0
    %v1308 = vpop.f32.mrb[0].mxu0
    %1309 = vdwg.mxu0
    %1310 = vmatprep.subr.bf16.mxu0 %v369
    %1311 = vmatpush1.bf16.msra.mxu0 %v368
    %1312 = vmatprep.subr.bf16.mxu0 %v385
    %1313 = vmatpush1.bf16.msra.mxu0 %v384
    %1314 = vmatprep.subr.bf16.mxu0 %v401
    %1315 = vmatpush1.bf16.msra.mxu0 %v400
    %1316 = vmatprep.subr.bf16.mxu0 %v417
    %1317 = vmatpush1.bf16.msra.mxu0 %v416
    %1318 = vmatprep.subr.bf16.mxu0 %v433
    %1319 = vmatpush1.bf16.msra.mxu0 %v432
    %1320 = vmatprep.subr.bf16.mxu0 %v449
    %1321 = vmatpush1.bf16.msra.mxu0 %v448
    %1322 = vmatprep.subr.bf16.mxu0 %v465
    %1323 = vmatpush1.bf16.msra.mxu0 %v464
    %1324 = vmatprep.subr.bf16.mxu0 %v481
    %1325 = vmatpush1.bf16.msra.mxu0 %v480
    %1326 = vmatprep.subr.bf16.mxu0 %v497
    %1327 = vmatpush1.bf16.msra.mxu0 %v496
    %1328 = vmatprep.subr.bf16.mxu0 %v513
    %1329 = vmatpush1.bf16.msra.mxu0 %v512
    %1330 = vmatprep.subr.bf16.mxu0 %v529
    %1331 = vmatpush1.bf16.msra.mxu0 %v528
    %1332 = vmatprep.subr.bf16.mxu0 %v545
    %1333 = vmatpush1.bf16.msra.mxu0 %v544
    %1334 = vmatprep.subr.bf16.mxu0 %v561
    %1335 = vmatpush1.bf16.msra.mxu0 %v560
    %1336 = vmatprep.subr.bf16.mxu0 %v577
    %1337 = vmatpush1.bf16.msra.mxu0 %v576
    %1338 = vmatprep.subr.bf16.mxu0 %v593
    %1339 = vmatpush1.bf16.msra.mxu0 %v592
    %1340 = vmatprep.subr.bf16.mxu0 %v609
    %1341 = vmatpush1.bf16.msra.mxu0 %v608
    %1342 = vmatprep.mubr.bf16.mxu0 %v893
    %1343 = vmatmul.mubr.bf16.gmra.mrb[0].mxu0 %v886
    %v1344 = vpop.f32.mrb[0].mxu0
    %v1345 = vadd.f32 0.0, %v1344
    %v1346 = vpop.f32.mrb[0].mxu0
    %v1347 = vadd.f32 0.0, %v1346
    %v1348 = vpop.f32.mrb[0].mxu0
    %v1349 = vpop.f32.mrb[0].mxu0
    %1350 = vdwg.mxu0
    %1351 = vmatprep.subr.bf16.mxu0 %v625
    %1352 = vmatpush1.bf16.msra.mxu0 %v624
    %1353 = vmatprep.subr.bf16.mxu0 %v641
    %1354 = vmatpush1.bf16.msra.mxu0 %v640
    %1355 = vmatprep.subr.bf16.mxu0 %v657
    %1356 = vmatpush1.bf16.msra.mxu0 %v656
    %1357 = vmatprep.subr.bf16.mxu0 %v673
    %1358 = vmatpush1.bf16.msra.mxu0 %v672
    %1359 = vmatprep.subr.bf16.mxu0 %v689
    %1360 = vmatpush1.bf16.msra.mxu0 %v688
    %1361 = vmatprep.subr.bf16.mxu0 %v705
    %1362 = vmatpush1.bf16.msra.mxu0 %v704
    %1363 = vmatprep.subr.bf16.mxu0 %v721
    %1364 = vmatpush1.bf16.msra.mxu0 %v720
    %1365 = vmatprep.subr.bf16.mxu0 %v737
    %1366 = vmatpush1.bf16.msra.mxu0 %v736
    %1367 = vmatprep.subr.bf16.mxu0 %v753
    %1368 = vmatpush1.bf16.msra.mxu0 %v752
    %1369 = vmatprep.subr.bf16.mxu0 %v769
    %1370 = vmatpush1.bf16.msra.mxu0 %v768
    %1371 = vmatprep.subr.bf16.mxu0 %v785
    %1372 = vmatpush1.bf16.msra.mxu0 %v784
    %1373 = vmatprep.subr.bf16.mxu0 %v801
    %1374 = vmatpush1.bf16.msra.mxu0 %v800
    %1375 = vmatprep.subr.bf16.mxu0 %v817
    %1376 = vmatpush1.bf16.msra.mxu0 %v816
    %1377 = vmatprep.subr.bf16.mxu0 %v833
    %1378 = vmatpush1.bf16.msra.mxu0 %v832
    %1379 = vmatprep.subr.bf16.mxu0 %v849
    %1380 = vmatpush1.bf16.msra.mxu0 %v848
    %1381 = vmatprep.subr.bf16.mxu0 %v865
    %1382 = vmatpush1.bf16.msra.mxu0 %v864
    %1383 = vmatprep.mubr.bf16.mxu0 %v895
    %1384 = vmatmul.mubr.bf16.gmra.mrb[0].mxu0 %v894
    %v1385 = vpop.f32.mrb[0].mxu0
    %v1386 = vadd.f32 %v1345, %v1385
    %v1387 = vpop.f32.mrb[0].mxu0
    %v1388 = vadd.f32 %v1347, %v1387
    %v1389 = vpop.f32.mrb[0].mxu0
    %v1390 = vpop.f32.mrb[0].mxu0
    %1391 = vdwg.mxu0
    %1392 = vmatprep.subr.bf16.mxu0 %v371
    %1393 = vmatpush1.bf16.msra.mxu0 %v370
    %1394 = vmatprep.subr.bf16.mxu0 %v387
    %1395 = vmatpush1.bf16.msra.mxu0 %v386
    %1396 = vmatprep.subr.bf16.mxu0 %v403
    %1397 = vmatpush1.bf16.msra.mxu0 %v402
    %1398 = vmatprep.subr.bf16.mxu0 %v419
    %1399 = vmatpush1.bf16.msra.mxu0 %v418
    %1400 = vmatprep.subr.bf16.mxu0 %v435
    %1401 = vmatpush1.bf16.msra.mxu0 %v434
    %1402 = vmatprep.subr.bf16.mxu0 %v451
    %1403 = vmatpush1.bf16.msra.mxu0 %v450
    %1404 = vmatprep.subr.bf16.mxu0 %v467
    %1405 = vmatpush1.bf16.msra.mxu0 %v466
    %1406 = vmatprep.subr.bf16.mxu0 %v483
    %1407 = vmatpush1.bf16.msra.mxu0 %v482
    %1408 = vmatprep.subr.bf16.mxu0 %v499
    %1409 = vmatpush1.bf16.msra.mxu0 %v498
    %1410 = vmatprep.subr.bf16.mxu0 %v515
    %1411 = vmatpush1.bf16.msra.mxu0 %v514
    %1412 = vmatprep.subr.bf16.mxu0 %v531
    %1413 = vmatpush1.bf16.msra.mxu0 %v530
    %1414 = vmatprep.subr.bf16.mxu0 %v547
    %1415 = vmatpush1.bf16.msra.mxu0 %v546
    %1416 = vmatprep.subr.bf16.mxu0 %v563
    %1417 = vmatpush1.bf16.msra.mxu0 %v562
    %1418 = vmatprep.subr.bf16.mxu0 %v579
    %1419 = vmatpush1.bf16.msra.mxu0 %v578
    %1420 = vmatprep.subr.bf16.mxu0 %v595
    %1421 = vmatpush1.bf16.msra.mxu0 %v594
    %1422 = vmatprep.subr.bf16.mxu0 %v611
    %1423 = vmatpush1.bf16.msra.mxu0 %v610
    %1424 = vmatprep.mubr.bf16.mxu0 %v893
    %1425 = vmatmul.mubr.bf16.gmra.mrb[0].mxu0 %v886
    %v1426 = vpop.f32.mrb[0].mxu0
    %v1427 = vadd.f32 0.0, %v1426
    %v1428 = vpop.f32.mrb[0].mxu0
    %v1429 = vadd.f32 0.0, %v1428
    %v1430 = vpop.f32.mrb[0].mxu0
    %v1431 = vpop.f32.mrb[0].mxu0
    %1432 = vdwg.mxu0
    %1433 = vmatprep.subr.bf16.mxu0 %v627
    %1434 = vmatpush1.bf16.msra.mxu0 %v626
    %1435 = vmatprep.subr.bf16.mxu0 %v643
    %1436 = vmatpush1.bf16.msra.mxu0 %v642
    %1437 = vmatprep.subr.bf16.mxu0 %v659
    %1438 = vmatpush1.bf16.msra.mxu0 %v658
    %1439 = vmatprep.subr.bf16.mxu0 %v675
    %1440 = vmatpush1.bf16.msra.mxu0 %v674
    %1441 = vmatprep.subr.bf16.mxu0 %v691
    %1442 = vmatpush1.bf16.msra.mxu0 %v690
    %1443 = vmatprep.subr.bf16.mxu0 %v707
    %1444 = vmatpush1.bf16.msra.mxu0 %v706
    %1445 = vmatprep.subr.bf16.mxu0 %v723
    %1446 = vmatpush1.bf16.msra.mxu0 %v722
    %1447 = vmatprep.subr.bf16.mxu0 %v739
    %1448 = vmatpush1.bf16.msra.mxu0 %v738
    %1449 = vmatprep.subr.bf16.mxu0 %v755
    %1450 = vmatpush1.bf16.msra.mxu0 %v754
    %1451 = vmatprep.subr.bf16.mxu0 %v771
    %1452 = vmatpush1.bf16.msra.mxu0 %v770
    %1453 = vmatprep.subr.bf16.mxu0 %v787
    %1454 = vmatpush1.bf16.msra.mxu0 %v786
    %1455 = vmatprep.subr.bf16.mxu0 %v803
    %1456 = vmatpush1.bf16.msra.mxu0 %v802
    %1457 = vmatprep.subr.bf16.mxu0 %v819
    %1458 = vmatpush1.bf16.msra.mxu0 %v818
    %1459 = vmatprep.subr.bf16.mxu0 %v835
    %1460 = vmatpush1.bf16.msra.mxu0 %v834
    %1461 = vmatprep.subr.bf16.mxu0 %v851
    %1462 = vmatpush1.bf16.msra.mxu0 %v850
    %1463 = vmatprep.subr.bf16.mxu0 %v867
    %1464 = vmatpush1.bf16.msra.mxu0 %v866
    %1465 = vmatprep.mubr.bf16.mxu0 %v895
    %1466 = vmatmul.mubr.bf16.gmra.mrb[0].mxu0 %v894
    %v1467 = vpop.f32.mrb[0].mxu0
    %v1468 = vadd.f32 %v1427, %v1467
    %v1469 = vpop.f32.mrb[0].mxu0
    %v1470 = vadd.f32 %v1429, %v1469
    %v1471 = vpop.f32.mrb[0].mxu0
    %v1472 = vpop.f32.mrb[0].mxu0
    %1473 = vdwg.mxu0
    %1474 = vmatprep.subr.bf16.mxu0 %v373
    %1475 = vmatpush1.bf16.msra.mxu0 %v372
    %1476 = vmatprep.subr.bf16.mxu0 %v389
    %1477 = vmatpush1.bf16.msra.mxu0 %v388
    %1478 = vmatprep.subr.bf16.mxu0 %v405
    %1479 = vmatpush1.bf16.msra.mxu0 %v404
    %1480 = vmatprep.subr.bf16.mxu0 %v421
    %1481 = vmatpush1.bf16.msra.mxu0 %v420
    %1482 = vmatprep.subr.bf16.mxu0 %v437
    %1483 = vmatpush1.bf16.msra.mxu0 %v436
    %1484 = vmatprep.subr.bf16.mxu0 %v453
    %1485 = vmatpush1.bf16.msra.mxu0 %v452
    %1486 = vmatprep.subr.bf16.mxu0 %v469
    %1487 = vmatpush1.bf16.msra.mxu0 %v468
    %1488 = vmatprep.subr.bf16.mxu0 %v485
    %1489 = vmatpush1.bf16.msra.mxu0 %v484
    %1490 = vmatprep.subr.bf16.mxu0 %v501
    %1491 = vmatpush1.bf16.msra.mxu0 %v500
    %1492 = vmatprep.subr.bf16.mxu0 %v517
    %1493 = vmatpush1.bf16.msra.mxu0 %v516
    %1494 = vmatprep.subr.bf16.mxu0 %v533
    %1495 = vmatpush1.bf16.msra.mxu0 %v532
    %1496 = vmatprep.subr.bf16.mxu0 %v549
    %1497 = vmatpush1.bf16.msra.mxu0 %v548
    %1498 = vmatprep.subr.bf16.mxu0 %v565
    %1499 = vmatpush1.bf16.msra.mxu0 %v564
    %1500 = vmatprep.subr.bf16.mxu0 %v581
    %1501 = vmatpush1.bf16.msra.mxu0 %v580
    %1502 = vmatprep.subr.bf16.mxu0 %v597
    %1503 = vmatpush1.bf16.msra.mxu0 %v596
    %1504 = vmatprep.subr.bf16.mxu0 %v613
    %1505 = vmatpush1.bf16.msra.mxu0 %v612
    %1506 = vmatprep.mubr.bf16.mxu0 %v893
    %1507 = vmatmul.mubr.bf16.gmra.mrb[0].mxu0 %v886
    %v1508 = vpop.f32.mrb[0].mxu0
    %v1509 = vadd.f32 0.0, %v1508
    %v1510 = vpop.f32.mrb[0].mxu0
    %v1511 = vadd.f32 0.0, %v1510
    %v1512 = vpop.f32.mrb[0].mxu0
    %v1513 = vpop.f32.mrb[0].mxu0
    %1514 = vdwg.mxu0
    %1515 = vmatprep.subr.bf16.mxu0 %v629
    %1516 = vmatpush1.bf16.msra.mxu0 %v628
    %1517 = vmatprep.subr.bf16.mxu0 %v645
    %1518 = vmatpush1.bf16.msra.mxu0 %v644
    %1519 = vmatprep.subr.bf16.mxu0 %v661
    %1520 = vmatpush1.bf16.msra.mxu0 %v660
    %1521 = vmatprep.subr.bf16.mxu0 %v677
    %1522 = vmatpush1.bf16.msra.mxu0 %v676
    %1523 = vmatprep.subr.bf16.mxu0 %v693
    %1524 = vmatpush1.bf16.msra.mxu0 %v692
    %1525 = vmatprep.subr.bf16.mxu0 %v709
    %1526 = vmatpush1.bf16.msra.mxu0 %v708
    %1527 = vmatprep.subr.bf16.mxu0 %v725
    %1528 = vmatpush1.bf16.msra.mxu0 %v724
    %1529 = vmatprep.subr.bf16.mxu0 %v741
    %1530 = vmatpush1.bf16.msra.mxu0 %v740
    %1531 = vmatprep.subr.bf16.mxu0 %v757
    %1532 = vmatpush1.bf16.msra.mxu0 %v756
    %1533 = vmatprep.subr.bf16.mxu0 %v773
    %1534 = vmatpush1.bf16.msra.mxu0 %v772
    %1535 = vmatprep.subr.bf16.mxu0 %v789
    %1536 = vmatpush1.bf16.msra.mxu0 %v788
    %1537 = vmatprep.subr.bf16.mxu0 %v805
    %1538 = vmatpush1.bf16.msra.mxu0 %v804
    %1539 = vmatprep.subr.bf16.mxu0 %v821
    %1540 = vmatpush1.bf16.msra.mxu0 %v820
    %1541 = vmatprep.subr.bf16.mxu0 %v837
    %1542 = vmatpush1.bf16.msra.mxu0 %v836
    %1543 = vmatprep.subr.bf16.mxu0 %v853
    %1544 = vmatpush1.bf16.msra.mxu0 %v852
    %1545 = vmatprep.subr.bf16.mxu0 %v869
    %1546 = vmatpush1.bf16.msra.mxu0 %v868
    %1547 = vmatprep.mubr.bf16.mxu0 %v895
    %1548 = vmatmul.mubr.bf16.gmra.mrb[0].mxu0 %v894
    %v1549 = vpop.f32.mrb[0].mxu0
    %v1550 = vadd.f32 %v1509, %v1549
    %v1551 = vpop.f32.mrb[0].mxu0
    %v1552 = vadd.f32 %v1511, %v1551
    %v1553 = vpop.f32.mrb[0].mxu0
    %v1554 = vpop.f32.mrb[0].mxu0
    %1555 = vdwg.mxu0
    %v1556 = vld [vmem:[#allocation7] sm:$0xff]
    %v1557 = vld [vmem:[#allocation7 + $0x8] sm:$0xff]
    %v1560 = vlaneseq
    %v1561 = vshrl.u32 %v1560, 7
    %v1562 = vsub.s32 0, %v1561
    %v1563 = vrot.slane %v1556, %v1562
    %v1564 = vlaneseq
    %v1565 = vshrl.u32 %v1564, 7
    %v1566 = vsub.s32 1, %v1565
    %v1567 = vrot.slane %v1556, %v1566
    %v1568 = vlaneseq
    %v1569 = vshrl.u32 %v1568, 7
    %v1570 = vsub.s32 2, %v1569
    %v1571 = vrot.slane %v1556, %v1570
    %v1572 = vlaneseq
    %v1573 = vshrl.u32 %v1572, 7
    %v1574 = vsub.s32 3, %v1573
    %v1575 = vrot.slane %v1556, %v1574
    %v1576 = vlaneseq
    %v1577 = vshrl.u32 %v1576, 7
    %v1578 = vsub.s32 4, %v1577
    %v1579 = vrot.slane %v1556, %v1578
    %v1580 = vlaneseq
    %v1581 = vshrl.u32 %v1580, 7
    %v1582 = vsub.s32 5, %v1581
    %v1583 = vrot.slane %v1556, %v1582
    %v1584 = vlaneseq
    %v1585 = vshrl.u32 %v1584, 7
    %v1586 = vsub.s32 6, %v1585
    %v1587 = vrot.slane %v1556, %v1586
    %v1588 = vlaneseq
    %v1589 = vshrl.u32 %v1588, 7
    %v1590 = vsub.s32 7, %v1589
    %v1591 = vrot.slane %v1556, %v1590
    %v1592 = vlaneseq
    %v1593 = vshrl.u32 %v1592, 7
    %v1594 = vsub.s32 0, %v1593
    %v1595 = vrot.slane %v1557, %v1594
    %v1596 = vlaneseq
    %v1597 = vshrl.u32 %v1596, 7
    %v1598 = vsub.s32 1, %v1597
    %v1599 = vrot.slane %v1557, %v1598
    %v1600 = vlaneseq
    %v1601 = vshrl.u32 %v1600, 7
    %v1602 = vsub.s32 2, %v1601
    %v1603 = vrot.slane %v1557, %v1602
    %v1604 = vlaneseq
    %v1605 = vshrl.u32 %v1604, 7
    %v1606 = vsub.s32 3, %v1605
    %v1607 = vrot.slane %v1557, %v1606
    %v1608 = vlaneseq
    %v1609 = vshrl.u32 %v1608, 7
    %v1610 = vsub.s32 4, %v1609
    %v1611 = vrot.slane %v1557, %v1610
    %v1612 = vlaneseq
    %v1613 = vshrl.u32 %v1612, 7
    %v1614 = vsub.s32 5, %v1613
    %v1615 = vrot.slane %v1557, %v1614
    %v1616 = vlaneseq
    %v1617 = vshrl.u32 %v1616, 7
    %v1618 = vsub.s32 6, %v1617
    %v1619 = vrot.slane %v1557, %v1618
    %v1620 = vlaneseq
    %v1621 = vshrl.u32 %v1620, 7
    %v1622 = vsub.s32 7, %v1621
    %v1623 = vrot.slane %v1557, %v1622
    %v1640 = vmul.f32 %v976, %v1563
    %v1641 = vmul.f32 %v978, %v1567
    %v1642 = vmul.f32 %v1058, %v1571
    %v1643 = vmul.f32 %v1060, %v1575
    %v1644 = vmul.f32 %v1140, %v1579
    %v1645 = vmul.f32 %v1142, %v1583
    %v1646 = vmul.f32 %v1222, %v1587
    %v1647 = vmul.f32 %v1224, %v1591
    %v1648 = vmul.f32 %v1304, %v1595
    %v1649 = vmul.f32 %v1306, %v1599
    %v1650 = vmul.f32 %v1386, %v1603
    %v1651 = vmul.f32 %v1388, %v1607
    %v1652 = vmul.f32 %v1468, %v1611
    %v1653 = vmul.f32 %v1470, %v1615
    %v1654 = vmul.f32 %v1550, %v1619
    %v1655 = vmul.f32 %v1552, %v1623
    %v1656 = vld [vmem:[#allocation8] sm:$0xff]
    %v1657 = vld [vmem:[#allocation8 + $0x8] sm:$0xff]
    %v1660 = vlaneseq
    %v1661 = vshrl.u32 %v1660, 7
    %v1662 = vsub.s32 0, %v1661
    %v1663 = vrot.slane %v1656, %v1662
    %v1664 = vlaneseq
    %v1665 = vshrl.u32 %v1664, 7
    %v1666 = vsub.s32 1, %v1665
    %v1667 = vrot.slane %v1656, %v1666
    %v1668 = vlaneseq
    %v1669 = vshrl.u32 %v1668, 7
    %v1670 = vsub.s32 2, %v1669
    %v1671 = vrot.slane %v1656, %v1670
    %v1672 = vlaneseq
    %v1673 = vshrl.u32 %v1672, 7
    %v1674 = vsub.s32 3, %v1673
    %v1675 = vrot.slane %v1656, %v1674
    %v1676 = vlaneseq
    %v1677 = vshrl.u32 %v1676, 7
    %v1678 = vsub.s32 4, %v1677
    %v1679 = vrot.slane %v1656, %v1678
    %v1680 = vlaneseq
    %v1681 = vshrl.u32 %v1680, 7
    %v1682 = vsub.s32 5, %v1681
    %v1683 = vrot.slane %v1656, %v1682
    %v1684 = vlaneseq
    %v1685 = vshrl.u32 %v1684, 7
    %v1686 = vsub.s32 6, %v1685
    %v1687 = vrot.slane %v1656, %v1686
    %v1688 = vlaneseq
    %v1689 = vshrl.u32 %v1688, 7
    %v1690 = vsub.s32 7, %v1689
    %v1691 = vrot.slane %v1656, %v1690
    %v1692 = vlaneseq
    %v1693 = vshrl.u32 %v1692, 7
    %v1694 = vsub.s32 0, %v1693
    %v1695 = vrot.slane %v1657, %v1694
    %v1696 = vlaneseq
    %v1697 = vshrl.u32 %v1696, 7
    %v1698 = vsub.s32 1, %v1697
    %v1699 = vrot.slane %v1657, %v1698
    %v1700 = vlaneseq
    %v1701 = vshrl.u32 %v1700, 7
    %v1702 = vsub.s32 2, %v1701
    %v1703 = vrot.slane %v1657, %v1702
    %v1704 = vlaneseq
    %v1705 = vshrl.u32 %v1704, 7
    %v1706 = vsub.s32 3, %v1705
    %v1707 = vrot.slane %v1657, %v1706
    %v1708 = vlaneseq
    %v1709 = vshrl.u32 %v1708, 7
    %v1710 = vsub.s32 4, %v1709
    %v1711 = vrot.slane %v1657, %v1710
    %v1712 = vlaneseq
    %v1713 = vshrl.u32 %v1712, 7
    %v1714 = vsub.s32 5, %v1713
    %v1715 = vrot.slane %v1657, %v1714
    %v1716 = vlaneseq
    %v1717 = vshrl.u32 %v1716, 7
    %v1718 = vsub.s32 6, %v1717
    %v1719 = vrot.slane %v1657, %v1718
    %v1720 = vlaneseq
    %v1721 = vshrl.u32 %v1720, 7
    %v1722 = vsub.s32 7, %v1721
    %v1723 = vrot.slane %v1657, %v1722
    %v1740 = vadd.f32 %v1640, %v1663
    %v1741 = vadd.f32 %v1641, %v1667
    %v1742 = vadd.f32 %v1642, %v1671
    %v1743 = vadd.f32 %v1643, %v1675
    %v1744 = vadd.f32 %v1644, %v1679
    %v1745 = vadd.f32 %v1645, %v1683
    %v1746 = vadd.f32 %v1646, %v1687
    %v1747 = vadd.f32 %v1647, %v1691
    %v1748 = vadd.f32 %v1648, %v1695
    %v1749 = vadd.f32 %v1649, %v1699
    %v1750 = vadd.f32 %v1650, %v1703
    %v1751 = vadd.f32 %v1651, %v1707
    %v1752 = vadd.f32 %v1652, %v1711
    %v1753 = vadd.f32 %v1653, %v1715
    %v1754 = vadd.f32 %v1654, %v1719
    %v1755 = vadd.f32 %v1655, %v1723
    %v1756 = vmax.f32 %v1740, 0.0
    %v1757 = vmax.f32 %v1741, 0.0
    %v1758 = vmax.f32 %v1742, 0.0
    %v1759 = vmax.f32 %v1743, 0.0
    %v1760 = vmax.f32 %v1744, 0.0
    %v1761 = vmax.f32 %v1745, 0.0
    %v1762 = vmax.f32 %v1746, 0.0
    %v1763 = vmax.f32 %v1747, 0.0
    %v1764 = vmax.f32 %v1748, 0.0
    %v1765 = vmax.f32 %v1749, 0.0
    %v1766 = vmax.f32 %v1750, 0.0
    %v1767 = vmax.f32 %v1751, 0.0
    %v1768 = vmax.f32 %v1752, 0.0
    %v1769 = vmax.f32 %v1753, 0.0
    %v1770 = vmax.f32 %v1754, 0.0
    %v1771 = vmax.f32 %v1755, 0.0
    %v1772 = vld [vmem:[#allocation10] sm:$0xff]
    %v1773 = vld [vmem:[#allocation10 + $0x8] sm:$0xff]
    %v1774 = vld [vmem:[#allocation10 + $0x10] sm:$0xff]
    %v1775 = vld [vmem:[#allocation10 + $0x18] sm:$0xff]
    %v1776 = vld [vmem:[#allocation10 + $0x20] sm:$0xff]
    %v1777 = vld [vmem:[#allocation10 + $0x28] sm:$0xff]
    %v1778 = vld [vmem:[#allocation10 + $0x30] sm:$0xff]
    %v1779 = vld [vmem:[#allocation10 + $0x38] sm:$0xff]
    %v1780 = vld [vmem:[#allocation10 + $0x40] sm:$0xff]
    %v1781 = vld [vmem:[#allocation10 + $0x48] sm:$0xff]
    %v1782 = vld [vmem:[#allocation10 + $0x50] sm:$0xff]
    %v1783 = vld [vmem:[#allocation10 + $0x58] sm:$0xff]
    %v1784 = vld [vmem:[#allocation10 + $0x60] sm:$0xff]
    %v1785 = vld [vmem:[#allocation10 + $0x68] sm:$0xff]
    %v1786 = vld [vmem:[#allocation10 + $0x70] sm:$0xff]
    %v1787 = vld [vmem:[#allocation10 + $0x78] sm:$0xff]
    %v1788 = vld [vmem:[#allocation10 + $0x80] sm:$0xff]
    %v1789 = vld [vmem:[#allocation10 + $0x88] sm:$0xff]
    %v1790 = vld [vmem:[#allocation10 + $0x90] sm:$0xff]
    %v1791 = vld [vmem:[#allocation10 + $0x98] sm:$0xff]
    %v1792 = vld [vmem:[#allocation10 + $0xa0] sm:$0xff]
    %v1793 = vld [vmem:[#allocation10 + $0xa8] sm:$0xff]
    %v1794 = vld [vmem:[#allocation10 + $0xb0] sm:$0xff]
    %v1795 = vld [vmem:[#allocation10 + $0xb8] sm:$0xff]
    %v1796 = vld [vmem:[#allocation10 + $0xc0] sm:$0xff]
    %v1797 = vld [vmem:[#allocation10 + $0xc8] sm:$0xff]
    %v1798 = vld [vmem:[#allocation10 + $0xd0] sm:$0xff]
    %v1799 = vld [vmem:[#allocation10 + $0xd8] sm:$0xff]
    %v1800 = vld [vmem:[#allocation10 + $0xe0] sm:$0xff]
    %v1801 = vld [vmem:[#allocation10 + $0xe8] sm:$0xff]
    %v1802 = vld [vmem:[#allocation10 + $0xf0] sm:$0xff]
    %v1803 = vld [vmem:[#allocation10 + $0xf8] sm:$0xff]
    %v1804 = vld [vmem:[#allocation10 + $0x100] sm:$0xff]
    %v1805 = vld [vmem:[#allocation10 + $0x108] sm:$0xff]
    %v1806 = vld [vmem:[#allocation10 + $0x110] sm:$0xff]
    %v1807 = vld [vmem:[#allocation10 + $0x118] sm:$0xff]
    %v1808 = vld [vmem:[#allocation10 + $0x120] sm:$0xff]
    %v1809 = vld [vmem:[#allocation10 + $0x128] sm:$0xff]
    %v1810 = vld [vmem:[#allocation10 + $0x130] sm:$0xff]
    %v1811 = vld [vmem:[#allocation10 + $0x138] sm:$0xff]
    %v1812 = vld [vmem:[#allocation10 + $0x140] sm:$0xff]
    %v1813 = vld [vmem:[#allocation10 + $0x148] sm:$0xff]
    %v1814 = vld [vmem:[#allocation10 + $0x150] sm:$0xff]
    %v1815 = vld [vmem:[#allocation10 + $0x158] sm:$0xff]
    %v1816 = vld [vmem:[#allocation10 + $0x160] sm:$0xff]
    %v1817 = vld [vmem:[#allocation10 + $0x168] sm:$0xff]
    %v1818 = vld [vmem:[#allocation10 + $0x170] sm:$0xff]
    %v1819 = vld [vmem:[#allocation10 + $0x178] sm:$0xff]
    %v1820 = vld [vmem:[#allocation10 + $0x180] sm:$0xff]
    %v1821 = vld [vmem:[#allocation10 + $0x188] sm:$0xff]
    %v1822 = vld [vmem:[#allocation10 + $0x190] sm:$0xff]
    %v1823 = vld [vmem:[#allocation10 + $0x198] sm:$0xff]
    %v1824 = vld [vmem:[#allocation10 + $0x1a0] sm:$0xff]
    %v1825 = vld [vmem:[#allocation10 + $0x1a8] sm:$0xff]
    %v1826 = vld [vmem:[#allocation10 + $0x1b0] sm:$0xff]
    %v1827 = vld [vmem:[#allocation10 + $0x1b8] sm:$0xff]
    %v1828 = vld [vmem:[#allocation10 + $0x1c0] sm:$0xff]
    %v1829 = vld [vmem:[#allocation10 + $0x1c8] sm:$0xff]
    %v1830 = vld [vmem:[#allocation10 + $0x1d0] sm:$0xff]
    %v1831 = vld [vmem:[#allocation10 + $0x1d8] sm:$0xff]
    %v1832 = vld [vmem:[#allocation10 + $0x1e0] sm:$0xff]
    %v1833 = vld [vmem:[#allocation10 + $0x1e8] sm:$0xff]
    %v1834 = vld [vmem:[#allocation10 + $0x1f0] sm:$0xff]
    %v1835 = vld [vmem:[#allocation10 + $0x1f8] sm:$0xff]
    %v1836 = vunpack.c.l.s8.bf16 %v1772
    %v1837 = vunpack.c.h.s8.bf16 %v1772
    %v1838 = vunpack.c.l.s8.bf16 %v1773
    %v1839 = vunpack.c.h.s8.bf16 %v1773
    %v1840 = vunpack.c.l.s8.bf16 %v1774
    %v1841 = vunpack.c.h.s8.bf16 %v1774
    %v1842 = vunpack.c.l.s8.bf16 %v1775
    %v1843 = vunpack.c.h.s8.bf16 %v1775
    %v1844 = vunpack.c.l.s8.bf16 %v1776
    %v1845 = vunpack.c.h.s8.bf16 %v1776
    %v1846 = vunpack.c.l.s8.bf16 %v1777
    %v1847 = vunpack.c.h.s8.bf16 %v1777
    %v1848 = vunpack.c.l.s8.bf16 %v1778
    %v1849 = vunpack.c.h.s8.bf16 %v1778
    %v1850 = vunpack.c.l.s8.bf16 %v1779
    %v1851 = vunpack.c.h.s8.bf16 %v1779
    %v1852 = vunpack.c.l.s8.bf16 %v1780
    %v1853 = vunpack.c.h.s8.bf16 %v1780
    %v1854 = vunpack.c.l.s8.bf16 %v1781
    %v1855 = vunpack.c.h.s8.bf16 %v1781
    %v1856 = vunpack.c.l.s8.bf16 %v1782
    %v1857 = vunpack.c.h.s8.bf16 %v1782
    %v1858 = vunpack.c.l.s8.bf16 %v1783
    %v1859 = vunpack.c.h.s8.bf16 %v1783
    %v1860 = vunpack.c.l.s8.bf16 %v1784
    %v1861 = vunpack.c.h.s8.bf16 %v1784
    %v1862 = vunpack.c.l.s8.bf16 %v1785
    %v1863 = vunpack.c.h.s8.bf16 %v1785
    %v1864 = vunpack.c.l.s8.bf16 %v1786
    %v1865 = vunpack.c.h.s8.bf16 %v1786
    %v1866 = vunpack.c.l.s8.bf16 %v1787
    %v1867 = vunpack.c.h.s8.bf16 %v1787
    %v1868 = vunpack.c.l.s8.bf16 %v1788
    %v1869 = vunpack.c.h.s8.bf16 %v1788
    %v1870 = vunpack.c.l.s8.bf16 %v1789
    %v1871 = vunpack.c.h.s8.bf16 %v1789
    %v1872 = vunpack.c.l.s8.bf16 %v1790
    %v1873 = vunpack.c.h.s8.bf16 %v1790
    %v1874 = vunpack.c.l.s8.bf16 %v1791
    %v1875 = vunpack.c.h.s8.bf16 %v1791
    %v1876 = vunpack.c.l.s8.bf16 %v1792
    %v1877 = vunpack.c.h.s8.bf16 %v1792
    %v1878 = vunpack.c.l.s8.bf16 %v1793
    %v1879 = vunpack.c.h.s8.bf16 %v1793
    %v1880 = vunpack.c.l.s8.bf16 %v1794
    %v1881 = vunpack.c.h.s8.bf16 %v1794
    %v1882 = vunpack.c.l.s8.bf16 %v1795
    %v1883 = vunpack.c.h.s8.bf16 %v1795
    %v1884 = vunpack.c.l.s8.bf16 %v1796
    %v1885 = vunpack.c.h.s8.bf16 %v1796
    %v1886 = vunpack.c.l.s8.bf16 %v1797
    %v1887 = vunpack.c.h.s8.bf16 %v1797
    %v1888 = vunpack.c.l.s8.bf16 %v1798
    %v1889 = vunpack.c.h.s8.bf16 %v1798
    %v1890 = vunpack.c.l.s8.bf16 %v1799
    %v1891 = vunpack.c.h.s8.bf16 %v1799
    %v1892 = vunpack.c.l.s8.bf16 %v1800
    %v1893 = vunpack.c.h.s8.bf16 %v1800
    %v1894 = vunpack.c.l.s8.bf16 %v1801
    %v1895 = vunpack.c.h.s8.bf16 %v1801
    %v1896 = vunpack.c.l.s8.bf16 %v1802
    %v1897 = vunpack.c.h.s8.bf16 %v1802
    %v1898 = vunpack.c.l.s8.bf16 %v1803
    %v1899 = vunpack.c.h.s8.bf16 %v1803
    %v1900 = vunpack.c.l.s8.bf16 %v1804
    %v1901 = vunpack.c.h.s8.bf16 %v1804
    %v1902 = vunpack.c.l.s8.bf16 %v1805
    %v1903 = vunpack.c.h.s8.bf16 %v1805
    %v1904 = vunpack.c.l.s8.bf16 %v1806
    %v1905 = vunpack.c.h.s8.bf16 %v1806
    %v1906 = vunpack.c.l.s8.bf16 %v1807
    %v1907 = vunpack.c.h.s8.bf16 %v1807
    %v1908 = vunpack.c.l.s8.bf16 %v1808
    %v1909 = vunpack.c.h.s8.bf16 %v1808
    %v1910 = vunpack.c.l.s8.bf16 %v1809
    %v1911 = vunpack.c.h.s8.bf16 %v1809
    %v1912 = vunpack.c.l.s8.bf16 %v1810
    %v1913 = vunpack.c.h.s8.bf16 %v1810
    %v1914 = vunpack.c.l.s8.bf16 %v1811
    %v1915 = vunpack.c.h.s8.bf16 %v1811
    %v1916 = vunpack.c.l.s8.bf16 %v1812
    %v1917 = vunpack.c.h.s8.bf16 %v1812
    %v1918 = vunpack.c.l.s8.bf16 %v1813
    %v1919 = vunpack.c.h.s8.bf16 %v1813
    %v1920 = vunpack.c.l.s8.bf16 %v1814
    %v1921 = vunpack.c.h.s8.bf16 %v1814
    %v1922 = vunpack.c.l.s8.bf16 %v1815
    %v1923 = vunpack.c.h.s8.bf16 %v1815
    %v1924 = vunpack.c.l.s8.bf16 %v1816
    %v1925 = vunpack.c.h.s8.bf16 %v1816
    %v1926 = vunpack.c.l.s8.bf16 %v1817
    %v1927 = vunpack.c.h.s8.bf16 %v1817
    %v1928 = vunpack.c.l.s8.bf16 %v1818
    %v1929 = vunpack.c.h.s8.bf16 %v1818
    %v1930 = vunpack.c.l.s8.bf16 %v1819
    %v1931 = vunpack.c.h.s8.bf16 %v1819
    %v1932 = vunpack.c.l.s8.bf16 %v1820
    %v1933 = vunpack.c.h.s8.bf16 %v1820
    %v1934 = vunpack.c.l.s8.bf16 %v1821
    %v1935 = vunpack.c.h.s8.bf16 %v1821
    %v1936 = vunpack.c.l.s8.bf16 %v1822
    %v1937 = vunpack.c.h.s8.bf16 %v1822
    %v1938 = vunpack.c.l.s8.bf16 %v1823
    %v1939 = vunpack.c.h.s8.bf16 %v1823
    %v1940 = vunpack.c.l.s8.bf16 %v1824
    %v1941 = vunpack.c.h.s8.bf16 %v1824
    %v1942 = vunpack.c.l.s8.bf16 %v1825
    %v1943 = vunpack.c.h.s8.bf16 %v1825
    %v1944 = vunpack.c.l.s8.bf16 %v1826
    %v1945 = vunpack.c.h.s8.bf16 %v1826
    %v1946 = vunpack.c.l.s8.bf16 %v1827
    %v1947 = vunpack.c.h.s8.bf16 %v1827
    %v1948 = vunpack.c.l.s8.bf16 %v1828
    %v1949 = vunpack.c.h.s8.bf16 %v1828
    %v1950 = vunpack.c.l.s8.bf16 %v1829
    %v1951 = vunpack.c.h.s8.bf16 %v1829
    %v1952 = vunpack.c.l.s8.bf16 %v1830
    %v1953 = vunpack.c.h.s8.bf16 %v1830
    %v1954 = vunpack.c.l.s8.bf16 %v1831
    %v1955 = vunpack.c.h.s8.bf16 %v1831
    %v1956 = vunpack.c.l.s8.bf16 %v1832
    %v1957 = vunpack.c.h.s8.bf16 %v1832
    %v1958 = vunpack.c.l.s8.bf16 %v1833
    %v1959 = vunpack.c.h.s8.bf16 %v1833
    %v1960 = vunpack.c.l.s8.bf16 %v1834
    %v1961 = vunpack.c.h.s8.bf16 %v1834
    %v1962 = vunpack.c.l.s8.bf16 %v1835
    %v1963 = vunpack.c.h.s8.bf16 %v1835
    %v1964 = vpack.c.bf16 %v1756, %v1756
    %v1965 = vpack.c.bf16 %v1757, %v1757
    %v1966 = vpack.c.bf16 %v1758, %v1758
    %v1967 = vpack.c.bf16 %v1759, %v1759
    %v1968 = vpack.c.bf16 %v1760, %v1760
    %v1969 = vpack.c.bf16 %v1761, %v1761
    %v1970 = vpack.c.bf16 %v1762, %v1762
    %v1971 = vpack.c.bf16 %v1763, %v1763
    %v1972 = vpack.c.bf16 %v1764, %v1764
    %v1973 = vpack.c.bf16 %v1765, %v1765
    %v1974 = vpack.c.bf16 %v1766, %v1766
    %v1975 = vpack.c.bf16 %v1767, %v1767
    %v1976 = vpack.c.bf16 %v1768, %v1768
    %v1977 = vpack.c.bf16 %v1769, %v1769
    %v1978 = vpack.c.bf16 %v1770, %v1770
    %v1979 = vpack.c.bf16 %v1771, %v1771
    %1980 = vmatprep.subr.bf16.mxu0 0
    %1981 = vmatpush1.bf16.msra.mxu0 %v1836
    %1982 = vmatprep.subr.bf16.mxu0 0
    %1983 = vmatpush1.bf16.msra.mxu0 %v1837
    %1984 = vmatprep.subr.bf16.mxu0 0
    %1985 = vmatpush1.bf16.msra.mxu0 %v1838
    %1986 = vmatprep.subr.bf16.mxu0 0
    %1987 = vmatpush1.bf16.msra.mxu0 %v1839
    %1988 = vmatprep.subr.bf16.mxu0 0
    %1989 = vmatpush1.bf16.msra.mxu0 %v1840
    %1990 = vmatprep.subr.bf16.mxu0 0
    %1991 = vmatpush1.bf16.msra.mxu0 %v1841
    %1992 = vmatprep.subr.bf16.mxu0 0
    %1993 = vmatpush1.bf16.msra.mxu0 %v1842
    %1994 = vmatprep.subr.bf16.mxu0 0
    %1995 = vmatpush1.bf16.msra.mxu0 %v1843
    %1996 = vmatprep.subr.bf16.mxu0 0
    %1997 = vmatpush1.bf16.msra.mxu0 %v1844
    %1998 = vmatprep.subr.bf16.mxu0 0
    %1999 = vmatpush1.bf16.msra.mxu0 %v1845
    %2000 = vmatprep.subr.bf16.mxu0 0
    %2001 = vmatpush1.bf16.msra.mxu0 %v1846
    %2002 = vmatprep.subr.bf16.mxu0 0
    %2003 = vmatpush1.bf16.msra.mxu0 %v1847
    %2004 = vmatprep.subr.bf16.mxu0 0
    %2005 = vmatpush1.bf16.msra.mxu0 %v1848
    %2006 = vmatprep.subr.bf16.mxu0 0
    %2007 = vmatpush1.bf16.msra.mxu0 %v1849
    %2008 = vmatprep.subr.bf16.mxu0 0
    %2009 = vmatpush1.bf16.msra.mxu0 %v1850
    %2010 = vmatprep.subr.bf16.mxu0 0
    %2011 = vmatpush1.bf16.msra.mxu0 %v1851
    %2012 = vmatprep.mubr.bf16.mxu0 %v1965
    %2013 = vmatmul.mubr.bf16.gmra.mrb[0].mxu0 %v1964
    %v2014 = vpop.f32.mrb[0].mxu0
    %v2015 = vadd.f32 0.0, %v2014
    %v2016 = vpop.f32.mrb[0].mxu0
    %v2017 = vpop.f32.mrb[0].mxu0
    %v2018 = vpop.f32.mrb[0].mxu0
    %2019 = vdwg.mxu0
    %2020 = vmatprep.subr.bf16.mxu0 0
    %2021 = vmatpush1.bf16.msra.mxu0 %v1852
    %2022 = vmatprep.subr.bf16.mxu0 0
    %2023 = vmatpush1.bf16.msra.mxu0 %v1853
    %2024 = vmatprep.subr.bf16.mxu0 0
    %2025 = vmatpush1.bf16.msra.mxu0 %v1854
    %2026 = vmatprep.subr.bf16.mxu0 0
    %2027 = vmatpush1.bf16.msra.mxu0 %v1855
    %2028 = vmatprep.subr.bf16.mxu0 0
    %2029 = vmatpush1.bf16.msra.mxu0 %v1856
    %2030 = vmatprep.subr.bf16.mxu0 0
    %2031 = vmatpush1.bf16.msra.mxu0 %v1857
    %2032 = vmatprep.subr.bf16.mxu0 0
    %2033 = vmatpush1.bf16.msra.mxu0 %v1858
    %2034 = vmatprep.subr.bf16.mxu0 0
    %2035 = vmatpush1.bf16.msra.mxu0 %v1859
    %2036 = vmatprep.subr.bf16.mxu0 0
    %2037 = vmatpush1.bf16.msra.mxu0 %v1860
    %2038 = vmatprep.subr.bf16.mxu0 0
    %2039 = vmatpush1.bf16.msra.mxu0 %v1861
    %2040 = vmatprep.subr.bf16.mxu0 0
    %2041 = vmatpush1.bf16.msra.mxu0 %v1862
    %2042 = vmatprep.subr.bf16.mxu0 0
    %2043 = vmatpush1.bf16.msra.mxu0 %v1863
    %2044 = vmatprep.subr.bf16.mxu0 0
    %2045 = vmatpush1.bf16.msra.mxu0 %v1864
    %2046 = vmatprep.subr.bf16.mxu0 0
    %2047 = vmatpush1.bf16.msra.mxu0 %v1865
    %2048 = vmatprep.subr.bf16.mxu0 0
    %2049 = vmatpush1.bf16.msra.mxu0 %v1866
    %2050 = vmatprep.subr.bf16.mxu0 0
    %2051 = vmatpush1.bf16.msra.mxu0 %v1867
    %2052 = vmatprep.mubr.bf16.mxu0 %v1967
    %2053 = vmatmul.mubr.bf16.gmra.mrb[0].mxu0 %v1966
    %v2054 = vpop.f32.mrb[0].mxu0
    %v2055 = vadd.f32 %v2015, %v2054
    %v2056 = vpop.f32.mrb[0].mxu0
    %v2057 = vpop.f32.mrb[0].mxu0
    %v2058 = vpop.f32.mrb[0].mxu0
    %2059 = vdwg.mxu0
    %2060 = vmatprep.subr.bf16.mxu0 0
    %2061 = vmatpush1.bf16.msra.mxu0 %v1868
    %2062 = vmatprep.subr.bf16.mxu0 0
    %2063 = vmatpush1.bf16.msra.mxu0 %v1869
    %2064 = vmatprep.subr.bf16.mxu0 0
    %2065 = vmatpush1.bf16.msra.mxu0 %v1870
    %2066 = vmatprep.subr.bf16.mxu0 0
    %2067 = vmatpush1.bf16.msra.mxu0 %v1871
    %2068 = vmatprep.subr.bf16.mxu0 0
    %2069 = vmatpush1.bf16.msra.mxu0 %v1872
    %2070 = vmatprep.subr.bf16.mxu0 0
    %2071 = vmatpush1.bf16.msra.mxu0 %v1873
    %2072 = vmatprep.subr.bf16.mxu0 0
    %2073 = vmatpush1.bf16.msra.mxu0 %v1874
    %2074 = vmatprep.subr.bf16.mxu0 0
    %2075 = vmatpush1.bf16.msra.mxu0 %v1875
    %2076 = vmatprep.subr.bf16.mxu0 0
    %2077 = vmatpush1.bf16.msra.mxu0 %v1876
    %2078 = vmatprep.subr.bf16.mxu0 0
    %2079 = vmatpush1.bf16.msra.mxu0 %v1877
    %2080 = vmatprep.subr.bf16.mxu0 0
    %2081 = vmatpush1.bf16.msra.mxu0 %v1878
    %2082 = vmatprep.subr.bf16.mxu0 0
    %2083 = vmatpush1.bf16.msra.mxu0 %v1879
    %2084 = vmatprep.subr.bf16.mxu0 0
    %2085 = vmatpush1.bf16.msra.mxu0 %v1880
    %2086 = vmatprep.subr.bf16.mxu0 0
    %2087 = vmatpush1.bf16.msra.mxu0 %v1881
    %2088 = vmatprep.subr.bf16.mxu0 0
    %2089 = vmatpush1.bf16.msra.mxu0 %v1882
    %2090 = vmatprep.subr.bf16.mxu0 0
    %2091 = vmatpush1.bf16.msra.mxu0 %v1883
    %2092 = vmatprep.mubr.bf16.mxu0 %v1969
    %2093 = vmatmul.mubr.bf16.gmra.mrb[0].mxu0 %v1968
    %v2094 = vpop.f32.mrb[0].mxu0
    %v2095 = vadd.f32 %v2055, %v2094
    %v2096 = vpop.f32.mrb[0].mxu0
    %v2097 = vpop.f32.mrb[0].mxu0
    %v2098 = vpop.f32.mrb[0].mxu0
    %2099 = vdwg.mxu0
    %2100 = vmatprep.subr.bf16.mxu0 0
    %2101 = vmatpush1.bf16.msra.mxu0 %v1884
    %2102 = vmatprep.subr.bf16.mxu0 0
    %2103 = vmatpush1.bf16.msra.mxu0 %v1885
    %2104 = vmatprep.subr.bf16.mxu0 0
    %2105 = vmatpush1.bf16.msra.mxu0 %v1886
    %2106 = vmatprep.subr.bf16.mxu0 0
    %2107 = vmatpush1.bf16.msra.mxu0 %v1887
    %2108 = vmatprep.subr.bf16.mxu0 0
    %2109 = vmatpush1.bf16.msra.mxu0 %v1888
    %2110 = vmatprep.subr.bf16.mxu0 0
    %2111 = vmatpush1.bf16.msra.mxu0 %v1889
    %2112 = vmatprep.subr.bf16.mxu0 0
    %2113 = vmatpush1.bf16.msra.mxu0 %v1890
    %2114 = vmatprep.subr.bf16.mxu0 0
    %2115 = vmatpush1.bf16.msra.mxu0 %v1891
    %2116 = vmatprep.subr.bf16.mxu0 0
    %2117 = vmatpush1.bf16.msra.mxu0 %v1892
    %2118 = vmatprep.subr.bf16.mxu0 0
    %2119 = vmatpush1.bf16.msra.mxu0 %v1893
    %2120 = vmatprep.subr.bf16.mxu0 0
    %2121 = vmatpush1.bf16.msra.mxu0 %v1894
    %2122 = vmatprep.subr.bf16.mxu0 0
    %2123 = vmatpush1.bf16.msra.mxu0 %v1895
    %2124 = vmatprep.subr.bf16.mxu0 0
    %2125 = vmatpush1.bf16.msra.mxu0 %v1896
    %2126 = vmatprep.subr.bf16.mxu0 0
    %2127 = vmatpush1.bf16.msra.mxu0 %v1897
    %2128 = vmatprep.subr.bf16.mxu0 0
    %2129 = vmatpush1.bf16.msra.mxu0 %v1898
    %2130 = vmatprep.subr.bf16.mxu0 0
    %2131 = vmatpush1.bf16.msra.mxu0 %v1899
    %2132 = vmatprep.mubr.bf16.mxu0 %v1971
    %2133 = vmatmul.mubr.bf16.gmra.mrb[0].mxu0 %v1970
    %v2134 = vpop.f32.mrb[0].mxu0
    %v2135 = vadd.f32 %v2095, %v2134
    %v2136 = vpop.f32.mrb[0].mxu0
    %v2137 = vpop.f32.mrb[0].mxu0
    %v2138 = vpop.f32.mrb[0].mxu0
    %2139 = vdwg.mxu0
    %2140 = vmatprep.subr.bf16.mxu0 0
    %2141 = vmatpush1.bf16.msra.mxu0 %v1900
    %2142 = vmatprep.subr.bf16.mxu0 0
    %2143 = vmatpush1.bf16.msra.mxu0 %v1901
    %2144 = vmatprep.subr.bf16.mxu0 0
    %2145 = vmatpush1.bf16.msra.mxu0 %v1902
    %2146 = vmatprep.subr.bf16.mxu0 0
    %2147 = vmatpush1.bf16.msra.mxu0 %v1903
    %2148 = vmatprep.subr.bf16.mxu0 0
    %2149 = vmatpush1.bf16.msra.mxu0 %v1904
    %2150 = vmatprep.subr.bf16.mxu0 0
    %2151 = vmatpush1.bf16.msra.mxu0 %v1905
    %2152 = vmatprep.subr.bf16.mxu0 0
    %2153 = vmatpush1.bf16.msra.mxu0 %v1906
    %2154 = vmatprep.subr.bf16.mxu0 0
    %2155 = vmatpush1.bf16.msra.mxu0 %v1907
    %2156 = vmatprep.subr.bf16.mxu0 0
    %2157 = vmatpush1.bf16.msra.mxu0 %v1908
    %2158 = vmatprep.subr.bf16.mxu0 0
    %2159 = vmatpush1.bf16.msra.mxu0 %v1909
    %2160 = vmatprep.subr.bf16.mxu0 0
    %2161 = vmatpush1.bf16.msra.mxu0 %v1910
    %2162 = vmatprep.subr.bf16.mxu0 0
    %2163 = vmatpush1.bf16.msra.mxu0 %v1911
    %2164 = vmatprep.subr.bf16.mxu0 0
    %2165 = vmatpush1.bf16.msra.mxu0 %v1912
    %2166 = vmatprep.subr.bf16.mxu0 0
    %2167 = vmatpush1.bf16.msra.mxu0 %v1913
    %2168 = vmatprep.subr.bf16.mxu0 0
    %2169 = vmatpush1.bf16.msra.mxu0 %v1914
    %2170 = vmatprep.subr.bf16.mxu0 0
    %2171 = vmatpush1.bf16.msra.mxu0 %v1915
    %2172 = vmatprep.mubr.bf16.mxu0 %v1973
    %2173 = vmatmul.mubr.bf16.gmra.mrb[0].mxu0 %v1972
    %v2174 = vpop.f32.mrb[0].mxu0
    %v2175 = vadd.f32 %v2135, %v2174
    %v2176 = vpop.f32.mrb[0].mxu0
    %v2177 = vpop.f32.mrb[0].mxu0
    %v2178 = vpop.f32.mrb[0].mxu0
    %2179 = vdwg.mxu0
    %2180 = vmatprep.subr.bf16.mxu0 0
    %2181 = vmatpush1.bf16.msra.mxu0 %v1916
    %2182 = vmatprep.subr.bf16.mxu0 0
    %2183 = vmatpush1.bf16.msra.mxu0 %v1917
    %2184 = vmatprep.subr.bf16.mxu0 0
    %2185 = vmatpush1.bf16.msra.mxu0 %v1918
    %2186 = vmatprep.subr.bf16.mxu0 0
    %2187 = vmatpush1.bf16.msra.mxu0 %v1919
    %2188 = vmatprep.subr.bf16.mxu0 0
    %2189 = vmatpush1.bf16.msra.mxu0 %v1920
    %2190 = vmatprep.subr.bf16.mxu0 0
    %2191 = vmatpush1.bf16.msra.mxu0 %v1921
    %2192 = vmatprep.subr.bf16.mxu0 0
    %2193 = vmatpush1.bf16.msra.mxu0 %v1922
    %2194 = vmatprep.subr.bf16.mxu0 0
    %2195 = vmatpush1.bf16.msra.mxu0 %v1923
    %2196 = vmatprep.subr.bf16.mxu0 0
    %2197 = vmatpush1.bf16.msra.mxu0 %v1924
    %2198 = vmatprep.subr.bf16.mxu0 0
    %2199 = vmatpush1.bf16.msra.mxu0 %v1925
    %2200 = vmatprep.subr.bf16.mxu0 0
    %2201 = vmatpush1.bf16.msra.mxu0 %v1926
    %2202 = vmatprep.subr.bf16.mxu0 0
    %2203 = vmatpush1.bf16.msra.mxu0 %v1927
    %2204 = vmatprep.subr.bf16.mxu0 0
    %2205 = vmatpush1.bf16.msra.mxu0 %v1928
    %2206 = vmatprep.subr.bf16.mxu0 0
    %2207 = vmatpush1.bf16.msra.mxu0 %v1929
    %2208 = vmatprep.subr.bf16.mxu0 0
    %2209 = vmatpush1.bf16.msra.mxu0 %v1930
    %2210 = vmatprep.subr.bf16.mxu0 0
    %2211 = vmatpush1.bf16.msra.mxu0 %v1931
    %2212 = vmatprep.mubr.bf16.mxu0 %v1975
    %2213 = vmatmul.mubr.bf16.gmra.mrb[0].mxu0 %v1974
    %v2214 = vpop.f32.mrb[0].mxu0
    %v2215 = vadd.f32 %v2175, %v2214
    %v2216 = vpop.f32.mrb[0].mxu0
    %v2217 = vpop.f32.mrb[0].mxu0
    %v2218 = vpop.f32.mrb[0].mxu0
    %2219 = vdwg.mxu0
    %2220 = vmatprep.subr.bf16.mxu0 0
    %2221 = vmatpush1.bf16.msra.mxu0 %v1932
    %2222 = vmatprep.subr.bf16.mxu0 0
    %2223 = vmatpush1.bf16.msra.mxu0 %v1933
    %2224 = vmatprep.subr.bf16.mxu0 0
    %2225 = vmatpush1.bf16.msra.mxu0 %v1934
    %2226 = vmatprep.subr.bf16.mxu0 0
    %2227 = vmatpush1.bf16.msra.mxu0 %v1935
    %2228 = vmatprep.subr.bf16.mxu0 0
    %2229 = vmatpush1.bf16.msra.mxu0 %v1936
    %2230 = vmatprep.subr.bf16.mxu0 0
    %2231 = vmatpush1.bf16.msra.mxu0 %v1937
    %2232 = vmatprep.subr.bf16.mxu0 0
    %2233 = vmatpush1.bf16.msra.mxu0 %v1938
    %2234 = vmatprep.subr.bf16.mxu0 0
    %2235 = vmatpush1.bf16.msra.mxu0 %v1939
    %2236 = vmatprep.subr.bf16.mxu0 0
    %2237 = vmatpush1.bf16.msra.mxu0 %v1940
    %2238 = vmatprep.subr.bf16.mxu0 0
    %2239 = vmatpush1.bf16.msra.mxu0 %v1941
    %2240 = vmatprep.subr.bf16.mxu0 0
    %2241 = vmatpush1.bf16.msra.mxu0 %v1942
    %2242 = vmatprep.subr.bf16.mxu0 0
    %2243 = vmatpush1.bf16.msra.mxu0 %v1943
    %2244 = vmatprep.subr.bf16.mxu0 0
    %2245 = vmatpush1.bf16.msra.mxu0 %v1944
    %2246 = vmatprep.subr.bf16.mxu0 0
    %2247 = vmatpush1.bf16.msra.mxu0 %v1945
    %2248 = vmatprep.subr.bf16.mxu0 0
    %2249 = vmatpush1.bf16.msra.mxu0 %v1946
    %2250 = vmatprep.subr.bf16.mxu0 0
    %2251 = vmatpush1.bf16.msra.mxu0 %v1947
    %2252 = vmatprep.mubr.bf16.mxu0 %v1977
    %2253 = vmatmul.mubr.bf16.gmra.mrb[0].mxu0 %v1976
    %v2254 = vpop.f32.mrb[0].mxu0
    %v2255 = vadd.f32 %v2215, %v2254
    %v2256 = vpop.f32.mrb[0].mxu0
    %v2257 = vpop.f32.mrb[0].mxu0
    %v2258 = vpop.f32.mrb[0].mxu0
    %2259 = vdwg.mxu0
    %2260 = vmatprep.subr.bf16.mxu0 0
    %2261 = vmatpush1.bf16.msra.mxu0 %v1948
    %2262 = vmatprep.subr.bf16.mxu0 0
    %2263 = vmatpush1.bf16.msra.mxu0 %v1949
    %2264 = vmatprep.subr.bf16.mxu0 0
    %2265 = vmatpush1.bf16.msra.mxu0 %v1950
    %2266 = vmatprep.subr.bf16.mxu0 0
    %2267 = vmatpush1.bf16.msra.mxu0 %v1951
    %2268 = vmatprep.subr.bf16.mxu0 0
    %2269 = vmatpush1.bf16.msra.mxu0 %v1952
    %2270 = vmatprep.subr.bf16.mxu0 0
    %2271 = vmatpush1.bf16.msra.mxu0 %v1953
    %2272 = vmatprep.subr.bf16.mxu0 0
    %2273 = vmatpush1.bf16.msra.mxu0 %v1954
    %2274 = vmatprep.subr.bf16.mxu0 0
    %2275 = vmatpush1.bf16.msra.mxu0 %v1955
    %2276 = vmatprep.subr.bf16.mxu0 0
    %2277 = vmatpush1.bf16.msra.mxu0 %v1956
    %2278 = vmatprep.subr.bf16.mxu0 0
    %2279 = vmatpush1.bf16.msra.mxu0 %v1957
    %2280 = vmatprep.subr.bf16.mxu0 0
    %2281 = vmatpush1.bf16.msra.mxu0 %v1958
    %2282 = vmatprep.subr.bf16.mxu0 0
    %2283 = vmatpush1.bf16.msra.mxu0 %v1959
    %2284 = vmatprep.subr.bf16.mxu0 0
    %2285 = vmatpush1.bf16.msra.mxu0 %v1960
    %2286 = vmatprep.subr.bf16.mxu0 0
    %2287 = vmatpush1.bf16.msra.mxu0 %v1961
    %2288 = vmatprep.subr.bf16.mxu0 0
    %2289 = vmatpush1.bf16.msra.mxu0 %v1962
    %2290 = vmatprep.subr.bf16.mxu0 0
    %2291 = vmatpush1.bf16.msra.mxu0 %v1963
    %2292 = vmatprep.mubr.bf16.mxu0 %v1979
    %2293 = vmatmul.mubr.bf16.gmra.mrb[0].mxu0 %v1978
    %v2294 = vpop.f32.mrb[0].mxu0
    %v2295 = vadd.f32 %v2255, %v2294
    %v2296 = vpop.f32.mrb[0].mxu0
    %v2297 = vpop.f32.mrb[0].mxu0
    %v2298 = vpop.f32.mrb[0].mxu0
    %2299 = vdwg.mxu0
    %v2300 = vld [vmem:[#allocation11] sm:$0x3]
    %v2301 = vld [vmem:[%s5] sm:$0x1]
    %v2303 = vlaneseq
    %v2304 = vshrl.u32 %v2303, 7
    %v2305 = vsub.s32 0, %v2304
    %v2306 = vrot.slane %v2301, %v2305
    %v2308 = vmul.f32 %v2295, %v2306
    %v2309 = vadd.f32 %v2300, %v2308
    %2310 = vst [vmem:[#allocation11] sm:$0x3] %v2309
    // Predicated region
    $region54: #{tpu_custom_call.1} parent=1 // pred_check
      _
    $region55: #{tpu_custom_call.1} parent=1 // pred_check_branch
      %2312 = sbr.rel (0) target = $region57
    $region56: #{tpu_custom_call.1} parent=1 // pred_region
      %s2314 = ssub.s32 32, 32
      %2315 = vsyncadd [#allocation4], %s2314
      %s2317 = sshll.u32 [#allocation11], 4
      %s2318 = int_to_ptr.vmem [resolvable:$true] %s2317
      %2320 = dma.vmem_to_hbm [thread:$0]  %s2318, 32, %s7, [#allocation4]
    $region57: #{tpu_custom_call.1} parent=1 // pred_fallthru
      _
    // Predicated region
    $region58: #{tpu_custom_call.1} parent=1 // pred_check
      _
    $region59: #{tpu_custom_call.1} parent=1 // pred_check_branch
      %2322 = sbr.rel (0) target = $region61
    $region60: #{tpu_custom_call.1} parent=1 // pred_region
      %2323 = dma.done [#allocation4], 32
    $region61: #{tpu_custom_call.1} parent=1 // pred_fallthru
      _
    %2324 = vsyncpa [#allocation3], 1
    %2325 = vsyncpa [#allocation6], 1
    %2326 = vsyncpa [#allocation9], 1
    %2327 = vsyncpa [#allocation4], 1

</llo_original>
